<compile_context>
chip_gen: v6e
topology: v6e:2x2x1
jax: 0.10.0
libtpu: 0.0.40
codegen_flags: <defaults>
</compile_context>

<pallas_src>
import functools

import jax
import jax.numpy as jnp
from jax import lax
from jax.experimental import pallas as pl
from jax.experimental.pallas import tpu as pltpu


# ----------------------------------------------------------------------------
# Fused kernel: embeddings + A renorm + GCN propagation + layer-mean + score
# ----------------------------------------------------------------------------
def _layergcn_kernel(
    lnc_sim_ref, dis_sim_ref, mir_sim_ref,
    lnc_w_ref, dis_w_ref, mir_w_ref,
    emb_b_ref, a_ref, w_ref,
    score_ref,
    *, n_layers, lnc_num, dis_num,
):
    eps = 1e-8

    # ---- fused ego embeddings: sigmoid([x_l@W_l ; x_d@W_d ; x_m@W_m] + b) ----
    # TODO(synk): nn.Dropout is stochastic and the identity at eval time; not applied.
    # TODO(synk): a single block-diagonal matmul would need non-lane-aligned
    # scratch stores (lane offsets 24/40 -> Mosaic lowering risk); the three
    # independent small dots overlap on the MXU instead, and the bias add +
    # sigmoid are fused into one pass over the sublane-aligned (24/16/24 rows,
    # all multiples of 8) concatenated result.  No ego scratch round trip.
    z = jnp.concatenate(
        [jnp.dot(lnc_sim_ref[...], lnc_w_ref[...], preferred_element_type=jnp.float32),
         jnp.dot(dis_sim_ref[...], dis_w_ref[...], preferred_element_type=jnp.float32),
         jnp.dot(mir_sim_ref[...], mir_w_ref[...], preferred_element_type=jnp.float32)],
        axis=0)                                            # (N, D)
    ego = jax.nn.sigmoid(z + emb_b_ref[...])               # (N, D) stays in vregs

    # ---- adjacency renormalization ------------------------------------------
    # TODO(synk): `re_normalization` is undefined in the reference source; the
    # standard symmetric GCN renormalization D^{-1/2} A D^{-1/2} is used.
    A = a_ref[...]                                          # (N, N)
    row_deg = jnp.sum(A, axis=1, keepdims=True)             # (N, 1) sublane-major
    col_deg = jnp.sum(A, axis=0, keepdims=True)             # (1, N) lane-major, no .T
    r_scale = jnp.where(row_deg > 0.0, lax.rsqrt(jnp.maximum(row_deg, 1e-12)), 0.0)
    c_scale = jnp.where(col_deg > 0.0, lax.rsqrt(jnp.maximum(col_deg, 1e-12)), 0.0)
    A_norm = r_scale * A * c_scale                          # (N, N)

    W = w_ref[...]                                          # (D, D)

    # torch cosine_similarity: dot / max(||a||*||b||, eps)
    ego_sq = jnp.sum(ego * ego, axis=-1, keepdims=True)     # (N, 1)

    x = ego
    acc = jnp.zeros_like(ego)
    # n_layers is static -> unrolled at trace time; at N=64/D=32 the live set
    # (A_norm, ego, x, acc + per-iter temporaries) fits the 64-vreg file.
    for _ in range(n_layers):
        xw = jnp.dot(x, W, preferred_element_type=jnp.float32)
        layer = jnp.maximum(
            jnp.dot(A_norm, xw, preferred_element_type=jnp.float32), 0.0)
        layer_sq = jnp.sum(layer * layer, axis=-1, keepdims=True)
        dotp = jnp.sum(layer * ego, axis=-1, keepdims=True)
        # dot * rsqrt(max(||a||^2*||b||^2, eps^2)) == dot / max(||a||*||b||, eps)
        cos = dotp * lax.rsqrt(jnp.maximum(layer_sq * ego_sq, eps * eps))
        x = layer                                  # unweighted embeddings propagate
        acc = acc + cos * layer                    # einsum('k,kj->kj', w, layer)

    all_emb = acc * (1.0 / n_layers)               # mean over stacked layers

    l_emb = all_emb[:lnc_num, :]                   # (24, D) sublane-aligned slice
    d_emb = all_emb[lnc_num:lnc_num + dis_num, :]  # (16, D) sublane-aligned slice

    # NT matmul via dot_general (contract last dims) — no transpose materialized.
    score_ref[...] = lax.dot_general(
        l_emb, d_emb,
        dimension_numbers=(((1,), (1,)), ((), ())),
        preferred_element_type=jnp.float32)


def layergcn_forward(A_stack, lnc_sim, dis_sim, miR_sim,
                     lnc_w, dis_w, mir_w, emb_b, weight,
                     *, n_layers, lnc_num, dis_num, mir_num):
    N = lnc_num + dis_num + mir_num
    D = weight.shape[0]

    kern = functools.partial(
        _layergcn_kernel, n_layers=n_layers, lnc_num=lnc_num, dis_num=dis_num)

    vmem = lambda: pl.BlockSpec(memory_space=pltpu.MemorySpace.VMEM)

    # Advisory hint: this custom call is microsecond-scale.
    flops = (2 * (lnc_num * lnc_num + dis_num * dis_num + mir_num * mir_num) * D
             + n_layers * 2 * (N * D * D + N * N * D)
             + 2 * lnc_num * dis_num * D)
    transcendentals = N * D + 2 * N + n_layers * N
    bytes_accessed = 4 * (lnc_num * lnc_num + dis_num * dis_num + mir_num * mir_num
                          + 2 * N * D + N * N + D * D + lnc_num * dis_num)
    cost = pl.CostEstimate(flops=int(flops),
                           transcendentals=int(transcendentals),
                           bytes_accessed=int(bytes_accessed))

    # NOTE: whole-array-resident design; if N ever grows past ~2k (A ~ N^2*4 B),
    # switch to a row-tiled grid with an "arbitrary" reduction axis and set
    # vmem_limit_bytes (v7x has 64 MiB physical VMEM vs 128 MiB on v5e/v6e).
    return pl.pallas_call(
        kern,
        out_shape=jax.ShapeDtypeStruct((lnc_num, dis_num), jnp.float32),
        in_specs=[vmem() for _ in range(9)],
        out_specs=vmem(),
        cost_estimate=cost,
    )(lnc_sim, dis_sim, miR_sim, lnc_w, dis_w, mir_w, emb_b, A_stack, weight)


# ----------------------------------------------------------------------------
# LayerGCN module in JAX (parameters + glue); hot path is ONE Pallas kernel.
# ----------------------------------------------------------------------------
class LayerGCNPallas:
    def __init__(self, lncRNA_num, disease_num, miRNA_num, latent_dim,
                 n_layers, dropout, key):
        self.lncRNA_num = lncRNA_num
        self.disease_num = disease_num
        self.miRNA_num = miRNA_num
        self.latent_dim = latent_dim
        self.n_layers = n_layers
        self.dropout = dropout  # unused at inference

        ks = jax.random.split(key, 7)

        # nn.Parameter(latent_dim, latent_dim) with kaiming_uniform_:
        # bound = sqrt(6 / fan_in), fan_in = latent_dim
        bound_w = (6.0 / latent_dim) ** 0.5
        self.weight = jax.random.uniform(
            ks[0], (latent_dim, latent_dim), jnp.float32, -bound_w, bound_w)

        def linear_params(kw, kb, in_feats, out_feats):
            # PyTorch Linear default init: U(-1/sqrt(fan_in), 1/sqrt(fan_in))
            bound = 1.0 / (in_feats ** 0.5)
            w = jax.random.uniform(kw, (in_feats, out_feats), jnp.float32,
                                   -bound, bound)        # stored pre-transposed
            b = jax.random.uniform(kb, (out_feats,), jnp.float32, -bound, bound)
            return w, b

        self.lnc_w, lnc_b = linear_params(ks[1], ks[2], lncRNA_num, latent_dim)
        self.dis_w, dis_b = linear_params(ks[3], ks[4], disease_num, latent_dim)
        self.mir_w, mir_b = linear_params(ks[5], ks[6], miRNA_num, latent_dim)

        # Stack the three bias vectors row-broadcast into one (N, D) kernel arg
        # (built once at init -> fewer kernel refs, one bias add in the kernel).
        self.emb_b = jnp.concatenate(
            [jnp.broadcast_to(lnc_b, (lncRNA_num, latent_dim)),
             jnp.broadcast_to(dis_b, (disease_num, latent_dim)),
             jnp.broadcast_to(mir_b, (miRNA_num, latent_dim))], axis=0)

    def __call__(self, A_stack, lnc_sim, dis_sim, miR_sim):
        # Inputs are expected to already be float32 (no per-call astype launches).
        return layergcn_forward(
            A_stack, lnc_sim, dis_sim, miR_sim,
            self.lnc_w, self.dis_w, self.mir_w, self.emb_b, self.weight,
            n_layers=self.n_layers,
            lnc_num=self.lncRNA_num,
            dis_num=self.disease_num,
            mir_num=self.miRNA_num)


if __name__ == "__main__":
    lncRNA_num, disease_num, miRNA_num = 24, 16, 24
    latent_dim, n_layers, dropout = 32, 3, 0.1
    N = lncRNA_num + disease_num + miRNA_num

    key = jax.random.PRNGKey(0)
    k_model, k_a, k_l, k_d, k_m = jax.random.split(key, 5)

    model = LayerGCNPallas(lncRNA_num, disease_num, miRNA_num,
                           latent_dim, n_layers, dropout, k_model)

    # Symmetric binary adjacency with self-loops (so every degree > 0), f32.
    A_rand = (jax.random.uniform(k_a, (N, N)) < 0.3).astype(jnp.float32)
    A_stack = jnp.maximum(A_rand, A_rand.T)
    A_stack = jnp.maximum(A_stack, jnp.eye(N, dtype=jnp.float32))

    lnc_sim = jax.random.uniform(k_l, (lncRNA_num, lncRNA_num), dtype=jnp.float32)
    dis_sim = jax.random.uniform(k_d, (disease_num, disease_num), dtype=jnp.float32)
    miR_sim = jax.random.uniform(k_m, (miRNA_num, miRNA_num), dtype=jnp.float32)

    score = model(A_stack, lnc_sim, dis_sim, miR_sim)
    score = jax.block_until_ready(score)

    assert score.shape == (lncRNA_num, disease_num)
    assert jnp.all(jnp.isfinite(score))
    print("KERNEL_OK")
</pallas_src>

<mosaic_0001>
module attributes {stable_mosaic.version = 11 : i64} {
  func.func @_layergcn_kernel(%arg0: memref<24x24xf32, #tpu.memory_space<vmem>>, %arg1: memref<16x16xf32, #tpu.memory_space<vmem>>, %arg2: memref<24x24xf32, #tpu.memory_space<vmem>>, %arg3: memref<24x32xf32, #tpu.memory_space<vmem>>, %arg4: memref<16x32xf32, #tpu.memory_space<vmem>>, %arg5: memref<24x32xf32, #tpu.memory_space<vmem>>, %arg6: memref<64x32xf32, #tpu.memory_space<vmem>>, %arg7: memref<64x64xf32, #tpu.memory_space<vmem>>, %arg8: memref<32x32xf32, #tpu.memory_space<vmem>>, %arg9: memref<24x16xf32, #tpu.memory_space<vmem>>) attributes {dimension_semantics = [], scalar_prefetch = 0 : i64, scratch_operands = 0 : i64, tpu.core_type = #tpu.core_type<tc>} {
    %c0 = arith.constant 0 : index
    %c0_0 = arith.constant 0 : index
    %0 = vector.load %arg0[%c0, %c0_0] : memref<24x24xf32, #tpu.memory_space<vmem>>, vector<24x24xf32>
    %c0_1 = arith.constant 0 : index
    %c0_2 = arith.constant 0 : index
    %1 = vector.load %arg3[%c0_1, %c0_2] : memref<24x32xf32, #tpu.memory_space<vmem>>, vector<24x32xf32>
    %cst = arith.constant dense<0.000000e+00> : vector<24x32xf32>
    %2 = tpu.matmul %0, %1, %cst {dimension_numbers = #tpu.dot_dimension_numbers<[1], [0], [0], [1], [0, 0, 1, 1], [], []>} : vector<24x24xf32>, vector<24x32xf32>, vector<24x32xf32> -> vector<24x32xf32>
    %c0_3 = arith.constant 0 : index
    %c0_4 = arith.constant 0 : index
    %3 = vector.load %arg1[%c0_3, %c0_4] : memref<16x16xf32, #tpu.memory_space<vmem>>, vector<16x16xf32>
    %c0_5 = arith.constant 0 : index
    %c0_6 = arith.constant 0 : index
    %4 = vector.load %arg4[%c0_5, %c0_6] : memref<16x32xf32, #tpu.memory_space<vmem>>, vector<16x32xf32>
    %cst_7 = arith.constant dense<0.000000e+00> : vector<16x32xf32>
    %5 = tpu.matmul %3, %4, %cst_7 {dimension_numbers = #tpu.dot_dimension_numbers<[1], [0], [0], [1], [0, 0, 1, 1], [], []>} : vector<16x16xf32>, vector<16x32xf32>, vector<16x32xf32> -> vector<16x32xf32>
    %c0_8 = arith.constant 0 : index
    %c0_9 = arith.constant 0 : index
    %6 = vector.load %arg2[%c0_8, %c0_9] : memref<24x24xf32, #tpu.memory_space<vmem>>, vector<24x24xf32>
    %c0_10 = arith.constant 0 : index
    %c0_11 = arith.constant 0 : index
    %7 = vector.load %arg5[%c0_10, %c0_11] : memref<24x32xf32, #tpu.memory_space<vmem>>, vector<24x32xf32>
    %cst_12 = arith.constant dense<0.000000e+00> : vector<24x32xf32>
    %8 = tpu.matmul %6, %7, %cst_12 {dimension_numbers = #tpu.dot_dimension_numbers<[1], [0], [0], [1], [0, 0, 1, 1], [], []>} : vector<24x24xf32>, vector<24x32xf32>, vector<24x32xf32> -> vector<24x32xf32>
    %9 = tpu.concatenate %2, %5, %8 in 0 : vector<24x32xf32>, vector<16x32xf32>, vector<24x32xf32> -> vector<64x32xf32>
    %c0_13 = arith.constant 0 : index
    %c0_14 = arith.constant 0 : index
    %10 = vector.load %arg6[%c0_13, %c0_14] : memref<64x32xf32, #tpu.memory_space<vmem>>, vector<64x32xf32>
    %11 = arith.addf %9, %10 : vector<64x32xf32>
    %12 = arith.negf %11 : vector<64x32xf32>
    %13 = math.exp %12 : vector<64x32xf32>
    %cst_15 = arith.constant 1.000000e+00 : f32
    %14 = vector.broadcast %cst_15 : f32 to vector<64x32xf32>
    %15 = arith.addf %14, %13 : vector<64x32xf32>
    %16 = arith.divf %14, %15 : vector<64x32xf32>
    %c0_16 = arith.constant 0 : index
    %c0_17 = arith.constant 0 : index
    %17 = vector.load %arg7[%c0_16, %c0_17] : memref<64x64xf32, #tpu.memory_space<vmem>>, vector<64x64xf32>
    %cst_18 = arith.constant dense<0.000000e+00> : vector<64xf32>
    %18 = vector.multi_reduction <add>, %17, %cst_18 [1] : vector<64x64xf32> to vector<64xf32>
    %19 = vector.shape_cast %18 : vector<64xf32> to vector<64x1xf32>
    %cst_19 = arith.constant dense<0.000000e+00> : vector<64xf32>
    %20 = vector.multi_reduction <add>, %17, %cst_19 [0] : vector<64x64xf32> to vector<64xf32>
    %21 = vector.shape_cast %20 : vector<64xf32> to vector<1x64xf32>
    %cst_20 = arith.constant 0.000000e+00 : f32
    %22 = vector.broadcast %cst_20 : f32 to vector<64x1xf32>
    %23 = arith.cmpf ogt, %19, %22 : vector<64x1xf32>
    %cst_21 = arith.constant 9.99999996E-13 : f32
    %24 = vector.broadcast %cst_21 : f32 to vector<64x1xf32>
    %25 = arith.maximumf %19, %24 : vector<64x1xf32>
    %26 = math.rsqrt %25 : vector<64x1xf32>
    %cst_22 = arith.constant 0.000000e+00 : f32
    %27 = vector.broadcast %cst_22 : f32 to vector<64x1xf32>
    %28 = arith.select %23, %26, %27 : vector<64x1xi1>, vector<64x1xf32>
    %cst_23 = arith.constant 0.000000e+00 : f32
    %29 = vector.broadcast %cst_23 : f32 to vector<1x64xf32>
    %30 = arith.cmpf ogt, %21, %29 : vector<1x64xf32>
    %cst_24 = arith.constant 9.99999996E-13 : f32
    %31 = vector.broadcast %cst_24 : f32 to vector<1x64xf32>
    %32 = arith.maximumf %21, %31 : vector<1x64xf32>
    %33 = math.rsqrt %32 : vector<1x64xf32>
    %cst_25 = arith.constant 0.000000e+00 : f32
    %34 = vector.broadcast %cst_25 : f32 to vector<1x64xf32>
    %35 = arith.select %30, %33, %34 : vector<1x64xi1>, vector<1x64xf32>
    %36 = vector.broadcast %28 : vector<64x1xf32> to vector<64x64xf32>
    %37 = arith.mulf %36, %17 : vector<64x64xf32>
    %38 = vector.broadcast %35 : vector<1x64xf32> to vector<64x64xf32>
    %39 = arith.mulf %37, %38 : vector<64x64xf32>
    %c0_26 = arith.constant 0 : index
    %c0_27 = arith.constant 0 : index
    %40 = vector.load %arg8[%c0_26, %c0_27] : memref<32x32xf32, #tpu.memory_space<vmem>>, vector<32x32xf32>
    %41 = arith.mulf %16, %16 : vector<64x32xf32>
    %cst_28 = arith.constant dense<0.000000e+00> : vector<64xf32>
    %42 = vector.multi_reduction <add>, %41, %cst_28 [1] : vector<64x32xf32> to vector<64xf32>
    %43 = vector.shape_cast %42 : vector<64xf32> to vector<64x1xf32>
    %cst_29 = arith.constant 0.000000e+00 : f32
    %44 = vector.broadcast %cst_29 : f32 to vector<64x32xf32>
    %cst_30 = arith.constant dense<0.000000e+00> : vector<64x32xf32>
    %45 = tpu.matmul %16, %40, %cst_30 {dimension_numbers = #tpu.dot_dimension_numbers<[1], [0], [0], [1], [0, 0, 1, 1], [], []>} : vector<64x32xf32>, vector<32x32xf32>, vector<64x32xf32> -> vector<64x32xf32>
    %cst_31 = arith.constant dense<0.000000e+00> : vector<64x32xf32>
    %46 = tpu.matmul %39, %45, %cst_31 {dimension_numbers = #tpu.dot_dimension_numbers<[1], [0], [0], [1], [0, 0, 1, 1], [], []>} : vector<64x64xf32>, vector<64x32xf32>, vector<64x32xf32> -> vector<64x32xf32>
    %cst_32 = arith.constant 0.000000e+00 : f32
    %47 = vector.broadcast %cst_32 : f32 to vector<64x32xf32>
    %48 = arith.maximumf %46, %47 : vector<64x32xf32>
    %49 = arith.mulf %48, %48 : vector<64x32xf32>
    %cst_33 = arith.constant dense<0.000000e+00> : vector<64xf32>
    %50 = vector.multi_reduction <add>, %49, %cst_33 [1] : vector<64x32xf32> to vector<64xf32>
    %51 = vector.shape_cast %50 : vector<64xf32> to vector<64x1xf32>
    %52 = arith.mulf %48, %16 : vector<64x32xf32>
    %cst_34 = arith.constant dense<0.000000e+00> : vector<64xf32>
    %53 = vector.multi_reduction <add>, %52, %cst_34 [1] : vector<64x32xf32> to vector<64xf32>
    %54 = vector.shape_cast %53 : vector<64xf32> to vector<64x1xf32>
    %55 = arith.mulf %51, %43 : vector<64x1xf32>
    %cst_35 = arith.constant 1.000000e-16 : f32
    %56 = vector.broadcast %cst_35 : f32 to vector<64x1xf32>
    %57 = arith.maximumf %55, %56 : vector<64x1xf32>
    %58 = math.rsqrt %57 : vector<64x1xf32>
    %59 = arith.mulf %54, %58 : vector<64x1xf32>
    %60 = vector.broadcast %59 : vector<64x1xf32> to vector<64x32xf32>
    %61 = arith.mulf %60, %48 : vector<64x32xf32>
    %62 = arith.addf %44, %61 : vector<64x32xf32>
    %cst_36 = arith.constant dense<0.000000e+00> : vector<64x32xf32>
    %63 = tpu.matmul %48, %40, %cst_36 {dimension_numbers = #tpu.dot_dimension_numbers<[1], [0], [0], [1], [0, 0, 1, 1], [], []>} : vector<64x32xf32>, vector<32x32xf32>, vector<64x32xf32> -> vector<64x32xf32>
    %cst_37 = arith.constant dense<0.000000e+00> : vector<64x32xf32>
    %64 = tpu.matmul %39, %63, %cst_37 {dimension_numbers = #tpu.dot_dimension_numbers<[1], [0], [0], [1], [0, 0, 1, 1], [], []>} : vector<64x64xf32>, vector<64x32xf32>, vector<64x32xf32> -> vector<64x32xf32>
    %cst_38 = arith.constant 0.000000e+00 : f32
    %65 = vector.broadcast %cst_38 : f32 to vector<64x32xf32>
    %66 = arith.maximumf %64, %65 : vector<64x32xf32>
    %67 = arith.mulf %66, %66 : vector<64x32xf32>
    %cst_39 = arith.constant dense<0.000000e+00> : vector<64xf32>
    %68 = vector.multi_reduction <add>, %67, %cst_39 [1] : vector<64x32xf32> to vector<64xf32>
    %69 = vector.shape_cast %68 : vector<64xf32> to vector<64x1xf32>
    %70 = arith.mulf %66, %16 : vector<64x32xf32>
    %cst_40 = arith.constant dense<0.000000e+00> : vector<64xf32>
    %71 = vector.multi_reduction <add>, %70, %cst_40 [1] : vector<64x32xf32> to vector<64xf32>
    %72 = vector.shape_cast %71 : vector<64xf32> to vector<64x1xf32>
    %73 = arith.mulf %69, %43 : vector<64x1xf32>
    %cst_41 = arith.constant 1.000000e-16 : f32
    %74 = vector.broadcast %cst_41 : f32 to vector<64x1xf32>
    %75 = arith.maximumf %73, %74 : vector<64x1xf32>
    %76 = math.rsqrt %75 : vector<64x1xf32>
    %77 = arith.mulf %72, %76 : vector<64x1xf32>
    %78 = vector.broadcast %77 : vector<64x1xf32> to vector<64x32xf32>
    %79 = arith.mulf %78, %66 : vector<64x32xf32>
    %80 = arith.addf %62, %79 : vector<64x32xf32>
    %cst_42 = arith.constant dense<0.000000e+00> : vector<64x32xf32>
    %81 = tpu.matmul %66, %40, %cst_42 {dimension_numbers = #tpu.dot_dimension_numbers<[1], [0], [0], [1], [0, 0, 1, 1], [], []>} : vector<64x32xf32>, vector<32x32xf32>, vector<64x32xf32> -> vector<64x32xf32>
    %cst_43 = arith.constant dense<0.000000e+00> : vector<64x32xf32>
    %82 = tpu.matmul %39, %81, %cst_43 {dimension_numbers = #tpu.dot_dimension_numbers<[1], [0], [0], [1], [0, 0, 1, 1], [], []>} : vector<64x64xf32>, vector<64x32xf32>, vector<64x32xf32> -> vector<64x32xf32>
    %cst_44 = arith.constant 0.000000e+00 : f32
    %83 = vector.broadcast %cst_44 : f32 to vector<64x32xf32>
    %84 = arith.maximumf %82, %83 : vector<64x32xf32>
    %85 = arith.mulf %84, %84 : vector<64x32xf32>
    %cst_45 = arith.constant dense<0.000000e+00> : vector<64xf32>
    %86 = vector.multi_reduction <add>, %85, %cst_45 [1] : vector<64x32xf32> to vector<64xf32>
    %87 = vector.shape_cast %86 : vector<64xf32> to vector<64x1xf32>
    %88 = arith.mulf %84, %16 : vector<64x32xf32>
    %cst_46 = arith.constant dense<0.000000e+00> : vector<64xf32>
    %89 = vector.multi_reduction <add>, %88, %cst_46 [1] : vector<64x32xf32> to vector<64xf32>
    %90 = vector.shape_cast %89 : vector<64xf32> to vector<64x1xf32>
    %91 = arith.mulf %87, %43 : vector<64x1xf32>
    %cst_47 = arith.constant 1.000000e-16 : f32
    %92 = vector.broadcast %cst_47 : f32 to vector<64x1xf32>
    %93 = arith.maximumf %91, %92 : vector<64x1xf32>
    %94 = math.rsqrt %93 : vector<64x1xf32>
    %95 = arith.mulf %90, %94 : vector<64x1xf32>
    %96 = vector.broadcast %95 : vector<64x1xf32> to vector<64x32xf32>
    %97 = arith.mulf %96, %84 : vector<64x32xf32>
    %98 = arith.addf %80, %97 : vector<64x32xf32>
    %cst_48 = arith.constant 0.333333343 : f32
    %99 = vector.broadcast %cst_48 : f32 to vector<64x32xf32>
    %100 = arith.mulf %98, %99 : vector<64x32xf32>
    %101 = vector.extract_strided_slice %100 {offsets = [0, 0], sizes = [24, 32], strides = [1, 1]} : vector<64x32xf32> to vector<24x32xf32>
    %102 = vector.extract_strided_slice %100 {offsets = [24, 0], sizes = [16, 32], strides = [1, 1]} : vector<64x32xf32> to vector<16x32xf32>
    %cst_49 = arith.constant dense<0.000000e+00> : vector<24x16xf32>
    %103 = tpu.matmul %101, %102, %cst_49 {dimension_numbers = #tpu.dot_dimension_numbers<[1], [1], [0], [0], [0, 0, 1, 0], [], []>} : vector<24x32xf32>, vector<16x32xf32>, vector<24x16xf32> -> vector<24x16xf32>
    %c0_50 = arith.constant 0 : index
    %c0_51 = arith.constant 0 : index
    %104 = vector.load %arg9[%c0_50, %c0_51] : memref<24x16xf32, #tpu.memory_space<vmem>>, vector<24x16xf32>
    tpu.vector_store %arg9[%c0_50, %c0_51], %103 {strides = array<i32>} : memref<24x16xf32, #tpu.memory_space<vmem>>, vector<24x16xf32>,
    return
  }
}

</mosaic_0001>

<llo_original>
// kernel: tpu_custom_call.1
$region0: #{tpu_custom_call.1}
  #allocation0 [shape = 'u32[]', space=smem, size = 0x4, offset = 0x4, fixed_abs, tag = 'smem constant byte address 0x4 - core index']
  #allocation1 [shape = 'u32[144,128]{1,0:T(1,128)}', space=vmem, size = 0x12000, scoped, tag = 'internal scratch']
  %s0 = inlined_call_operand.hbm [shape: f32[24,24], index: 0, kind: input, shape index: {}]
  %s1 = inlined_call_operand.hbm [shape: f32[16,16], index: 1, kind: input, shape index: {}]
  %s2 = inlined_call_operand.hbm [shape: f32[24,24], index: 2, kind: input, shape index: {}]
  %s3 = inlined_call_operand.hbm [shape: f32[24,32], index: 3, kind: input, shape index: {}]
  %s4 = inlined_call_operand.hbm [shape: f32[16,32], index: 4, kind: input, shape index: {}]
  %s5 = inlined_call_operand.hbm [shape: f32[24,32], index: 5, kind: input, shape index: {}]
  %s6 = inlined_call_operand.vmem [shape: f32[64,32], index: 6, kind: input, shape index: {}]
  %s7 = inlined_call_operand.vmem [shape: f32[64,64], index: 7, kind: input, shape index: {}]
  %s8 = inlined_call_operand.vmem [shape: f32[32,32], index: 8, kind: input, shape index: {}]
  %s9 = inlined_call_operand.vmem [shape: f32[24,16], index: 9, kind: output, shape index: {}]
  %s10 = sld [smem:[#allocation0]]
  $region70: #{tpu_custom_call.1} parent=0
    _
  %s12 = ssub.s32 1, %s10
  %s13 = scalar_select 0, %s12, %s10
  $region1: #{tpu_custom_call.1} parent=0
    #allocation2 [shape = 'u8[12288]{0}', space=vmem, size = 0x3000, scoped, tag = 'input window, operand 0, single buffered']
    #allocation3 [shape = 's32[1]{0}', space=sflag, size = 0x4, scoped, tag = 'scoped memory for tpu_custom_call.1']
    #allocation4 [shape = 'u8[8192]{0}', space=vmem, size = 0x2000, scoped, tag = 'input window, operand 1, single buffered']
    #allocation5 [shape = 's32[1]{0}', space=sflag, size = 0x4, scoped, tag = 'scoped memory for tpu_custom_call.1']
    #allocation6 [shape = 'u8[12288]{0}', space=vmem, size = 0x3000, scoped, tag = 'input window, operand 2, single buffered']
    #allocation7 [shape = 'u8[12288]{0}', space=vmem, size = 0x3000, scoped, tag = 'input window, operand 3, single buffered']
    #allocation8 [shape = 's32[1]{0}', space=sflag, size = 0x4, scoped, tag = 'scoped memory for tpu_custom_call.1']
    #allocation9 [shape = 'u8[8192]{0}', space=vmem, size = 0x2000, scoped, tag = 'input window, operand 4, single buffered']
    #allocation10 [shape = 'u8[12288]{0}', space=vmem, size = 0x3000, scoped, tag = 'input window, operand 5, single buffered']
    #allocation11 [shape = 's32[1]{0}', space=sflag, size = 0x4, scoped, tag = 'scoped memory for tpu_custom_call.1']
    %14 = vsyncpa [#allocation3], 0
    %15 = vsyncpa [#allocation5], 0
    %16 = vsyncpa [#allocation8], 0
    %17 = vsyncpa [#allocation11], 0
    // Predicated region
    $region2: #{tpu_custom_call.1} parent=1 // pred_check
      _
    $region3: #{tpu_custom_call.1} parent=1 // pred_check_branch
      %19 = sbr.rel (0) target = $region5
    $region4: #{tpu_custom_call.1} parent=1 // pred_region
      %s21 = ssub.s32 384, 384
      %22 = vsyncadd [#allocation3], %s21
      %s23 = sshll.u32 [#allocation2], 4
      %s24 = int_to_ptr.vmem [resolvable:$true] %s23
      %29 = dma.hbm_to_vmem [thread:$0]  %s0, 384, %s24, [#allocation3], 128, 128, 8
    $region5: #{tpu_custom_call.1} parent=1 // pred_fallthru
      _
    // Predicated region
    $region6: #{tpu_custom_call.1} parent=1 // pred_check
      _
    $region7: #{tpu_custom_call.1} parent=1 // pred_check_branch
      %31 = sbr.rel (0) target = $region9
    $region8: #{tpu_custom_call.1} parent=1 // pred_region
      %s33 = ssub.s32 256, 256
      %34 = vsyncadd [#allocation5], %s33
      %s35 = sshll.u32 [#allocation4], 4
      %s36 = int_to_ptr.vmem [resolvable:$true] %s35
      %41 = dma.hbm_to_vmem [thread:$0]  %s1, 256, %s36, [#allocation5], 128, 128, 8
    $region9: #{tpu_custom_call.1} parent=1 // pred_fallthru
      _
    // Predicated region
    $region10: #{tpu_custom_call.1} parent=1 // pred_check
      _
    $region11: #{tpu_custom_call.1} parent=1 // pred_check_branch
      %43 = sbr.rel (0) target = $region13
    $region12: #{tpu_custom_call.1} parent=1 // pred_region
      %s45 = ssub.s32 384, 384
      %46 = vsyncadd [#allocation5], %s45
      %s47 = sshll.u32 [#allocation6], 4
      %s48 = int_to_ptr.vmem [resolvable:$true] %s47
      %53 = dma.hbm_to_vmem [thread:$0]  %s2, 384, %s48, [#allocation5], 128, 128, 8
    $region13: #{tpu_custom_call.1} parent=1 // pred_fallthru
      _
    // Predicated region
    $region14: #{tpu_custom_call.1} parent=1 // pred_check
      _
    $region15: #{tpu_custom_call.1} parent=1 // pred_check_branch
      %55 = sbr.rel (0) target = $region17
    $region16: #{tpu_custom_call.1} parent=1 // pred_region
      %s57 = ssub.s32 384, 384
      %58 = vsyncadd [#allocation8], %s57
      %s59 = sshll.u32 [#allocation7], 4
      %s60 = int_to_ptr.vmem [resolvable:$true] %s59
      %65 = dma.hbm_to_vmem [thread:$0]  %s3, 384, %s60, [#allocation8], 128, 128, 8
    $region17: #{tpu_custom_call.1} parent=1 // pred_fallthru
      _
    // Predicated region
    $region18: #{tpu_custom_call.1} parent=1 // pred_check
      _
    $region19: #{tpu_custom_call.1} parent=1 // pred_check_branch
      %67 = sbr.rel (0) target = $region21
    $region20: #{tpu_custom_call.1} parent=1 // pred_region
      %s69 = ssub.s32 256, 256
      %70 = vsyncadd [#allocation8], %s69
      %s71 = sshll.u32 [#allocation9], 4
      %s72 = int_to_ptr.vmem [resolvable:$true] %s71
      %77 = dma.hbm_to_vmem [thread:$0]  %s4, 256, %s72, [#allocation8], 128, 128, 8
    $region21: #{tpu_custom_call.1} parent=1 // pred_fallthru
      _
    // Predicated region
    $region22: #{tpu_custom_call.1} parent=1 // pred_check
      _
    $region23: #{tpu_custom_call.1} parent=1 // pred_check_branch
      %79 = sbr.rel (0) target = $region25
    $region24: #{tpu_custom_call.1} parent=1 // pred_region
      %s81 = ssub.s32 384, 384
      %82 = vsyncadd [#allocation11], %s81
      %s83 = sshll.u32 [#allocation10], 4
      %s84 = int_to_ptr.vmem [resolvable:$true] %s83
      %89 = dma.hbm_to_vmem [thread:$0]  %s5, 384, %s84, [#allocation11], 128, 128, 8
    $region25: #{tpu_custom_call.1} parent=1 // pred_fallthru
      _
    // Predicated region
    $region26: #{tpu_custom_call.1} parent=1 // pred_check
      _
    $region27: #{tpu_custom_call.1} parent=1 // pred_check_branch
      %91 = sbr.rel (0) target = $region29
    $region28: #{tpu_custom_call.1} parent=1 // pred_region
      _
    $region29: #{tpu_custom_call.1} parent=1 // pred_fallthru
      _
    // Predicated region
    $region30: #{tpu_custom_call.1} parent=1 // pred_check
      _
    $region31: #{tpu_custom_call.1} parent=1 // pred_check_branch
      %93 = sbr.rel (0) target = $region33
    $region32: #{tpu_custom_call.1} parent=1 // pred_region
      _
    $region33: #{tpu_custom_call.1} parent=1 // pred_fallthru
      _
    // Predicated region
    $region34: #{tpu_custom_call.1} parent=1 // pred_check
      _
    $region35: #{tpu_custom_call.1} parent=1 // pred_check_branch
      %95 = sbr.rel (0) target = $region37
    $region36: #{tpu_custom_call.1} parent=1 // pred_region
      _
    $region37: #{tpu_custom_call.1} parent=1 // pred_fallthru
      _
    // Predicated region
    $region38: #{tpu_custom_call.1} parent=1 // pred_check
      _
    $region39: #{tpu_custom_call.1} parent=1 // pred_check_branch
      %97 = sbr.rel (0) target = $region41
    $region40: #{tpu_custom_call.1} parent=1 // pred_region
      %98 = dma.done [#allocation3], 384
    $region41: #{tpu_custom_call.1} parent=1 // pred_fallthru
      _
    // Predicated region
    $region42: #{tpu_custom_call.1} parent=1 // pred_check
      _
    $region43: #{tpu_custom_call.1} parent=1 // pred_check_branch
      %100 = sbr.rel (0) target = $region45
    $region44: #{tpu_custom_call.1} parent=1 // pred_region
      %101 = dma.done [#allocation5], 256
    $region45: #{tpu_custom_call.1} parent=1 // pred_fallthru
      _
    // Predicated region
    $region46: #{tpu_custom_call.1} parent=1 // pred_check
      _
    $region47: #{tpu_custom_call.1} parent=1 // pred_check_branch
      %103 = sbr.rel (0) target = $region49
    $region48: #{tpu_custom_call.1} parent=1 // pred_region
      %104 = dma.done [#allocation5], 384
    $region49: #{tpu_custom_call.1} parent=1 // pred_fallthru
      _
    // Predicated region
    $region50: #{tpu_custom_call.1} parent=1 // pred_check
      _
    $region51: #{tpu_custom_call.1} parent=1 // pred_check_branch
      %106 = sbr.rel (0) target = $region53
    $region52: #{tpu_custom_call.1} parent=1 // pred_region
      %107 = dma.done [#allocation8], 384
    $region53: #{tpu_custom_call.1} parent=1 // pred_fallthru
      _
    // Predicated region
    $region54: #{tpu_custom_call.1} parent=1 // pred_check
      _
    $region55: #{tpu_custom_call.1} parent=1 // pred_check_branch
      %109 = sbr.rel (0) target = $region57
    $region56: #{tpu_custom_call.1} parent=1 // pred_region
      %110 = dma.done [#allocation8], 256
    $region57: #{tpu_custom_call.1} parent=1 // pred_fallthru
      _
    // Predicated region
    $region58: #{tpu_custom_call.1} parent=1 // pred_check
      _
    $region59: #{tpu_custom_call.1} parent=1 // pred_check_branch
      %112 = sbr.rel (0) target = $region61
    $region60: #{tpu_custom_call.1} parent=1 // pred_region
      %113 = dma.done [#allocation11], 384
    $region61: #{tpu_custom_call.1} parent=1 // pred_fallthru
      _
    %v114 = vld [vmem:[#allocation2] sm:$0xff]
    %v115 = vld [vmem:[#allocation2 + $0x8] sm:$0xff]
    %v116 = vld [vmem:[#allocation2 + $0x10] sm:$0xff]
    %v117 = vld [vmem:[#allocation7] sm:$0xff]
    %v118 = vld [vmem:[#allocation7 + $0x8] sm:$0xff]
    %v119 = vld [vmem:[#allocation7 + $0x10] sm:$0xff]
    %vm120 = vcmask 195584
    %v122 = vsel %vm120, %v114, 0
    %v125 = vsel %vm120, %v115, 0
    %v128 = vsel %vm120, %v116, 0
    %130 = vmatprep.subr.mxu0 0.0
    %131 = vmatpush1.msra.mxu0 0.0
    %132 = vmatprep.subr.mxu0 0.0
    %133 = vmatpush1.msra.mxu0 0.0
    %134 = vmatprep.subr.mxu0 0.0
    %135 = vmatpush1.msra.mxu0 0.0
    %136 = vmatprep.subr.mxu0 0.0
    %137 = vmatpush1.msra.mxu0 0.0
    %138 = vmatprep.subr.mxu0 0.0
    %139 = vmatpush1.msra.mxu0 0.0
    %140 = vmatprep.subr.mxu0 0.0
    %141 = vmatpush1.msra.mxu0 0.0
    %142 = vmatprep.subr.mxu0 0.0
    %143 = vmatpush1.msra.mxu0 0.0
    %144 = vmatprep.subr.mxu0 0.0
    %145 = vmatpush1.msra.mxu0 0.0
    %146 = vmatprep.subr.mxu0 0.0
    %147 = vmatpush1.msra.mxu0 0.0
    %148 = vmatprep.subr.mxu0 0.0
    %149 = vmatpush1.msra.mxu0 0.0
    %150 = vmatprep.subr.mxu0 0.0
    %151 = vmatpush1.msra.mxu0 0.0
    %152 = vmatprep.subr.mxu0 0.0
    %153 = vmatpush1.msra.mxu0 0.0
    %154 = vmatprep.subr.mxu0 0.0
    %155 = vmatpush1.msra.mxu0 0.0
    %156 = vmatprep.subr.mxu0 0.0
    %157 = vmatpush1.msra.mxu0 %v119
    %158 = vmatprep.subr.mxu0 0.0
    %159 = vmatpush1.msra.mxu0 %v118
    %160 = vmatprep.subr.mxu0 0.0
    %161 = vmatpush1.msra.mxu0 %v117
    %162 = vmatprep.subr.mxu0 0.0
    %163 = vmatpush2.msra.mxu0 0.0
    %164 = vmatprep.subr.mxu0 0.0
    %165 = vmatpush2.msra.mxu0 0.0
    %166 = vmatprep.subr.mxu0 0.0
    %167 = vmatpush2.msra.mxu0 0.0
    %168 = vmatprep.subr.mxu0 0.0
    %169 = vmatpush2.msra.mxu0 0.0
    %170 = vmatprep.subr.mxu0 0.0
    %171 = vmatpush2.msra.mxu0 0.0
    %172 = vmatprep.subr.mxu0 0.0
    %173 = vmatpush2.msra.mxu0 0.0
    %174 = vmatprep.subr.mxu0 0.0
    %175 = vmatpush2.msra.mxu0 0.0
    %176 = vmatprep.subr.mxu0 0.0
    %177 = vmatpush2.msra.mxu0 0.0
    %178 = vmatprep.subr.mxu0 0.0
    %179 = vmatpush2.msra.mxu0 0.0
    %180 = vmatprep.subr.mxu0 0.0
    %181 = vmatpush2.msra.mxu0 0.0
    %182 = vmatprep.subr.mxu0 0.0
    %183 = vmatpush2.msra.mxu0 0.0
    %184 = vmatprep.subr.mxu0 0.0
    %185 = vmatpush2.msra.mxu0 0.0
    %186 = vmatprep.subr.mxu0 0.0
    %187 = vmatpush2.msra.mxu0 0.0
    %188 = vmatprep.subr.mxu0 0.0
    %189 = vmatpush2.msra.mxu0 0.0
    %190 = vmatprep.subr.mxu0 0.0
    %191 = vmatpush2.msra.mxu0 0.0
    %192 = vmatprep.subr.mxu0 0.0
    %193 = vmatpush2.msra.mxu0 0.0
    %194 = vmatprep.mubr.f32.mxu0 0.0
    %195 = vmatmul.mubr.f32.gmra.mxu0 %v122
    %v196 = vpop.f32.mrf.mxu0
    %v197 = vadd.f32 0.0, %v196
    %v198 = vpop.f32.mrf.mxu0
    %199 = vmatprep.mubr.f32.mxu0 0.0
    %200 = vmatmul.mubr.f32.gmra.mxu0 %v125
    %v201 = vpop.f32.mrf.mxu0
    %v202 = vadd.f32 0.0, %v201
    %v203 = vpop.f32.mrf.mxu0
    %204 = vmatprep.mubr.f32.mxu0 0.0
    %205 = vmatmul.mubr.f32.gmra.mxu0 %v128
    %v206 = vpop.f32.mrf.mxu0
    %v207 = vadd.f32 0.0, %v206
    %v208 = vpop.f32.mrf.mxu0
    %209 = vdwg.mxu0
    %v210 = vld [vmem:[#allocation4] sm:$0xff]
    %v211 = vld [vmem:[#allocation4 + $0x8] sm:$0xff]
    %v212 = vld [vmem:[#allocation9] sm:$0xff]
    %v213 = vld [vmem:[#allocation9 + $0x8] sm:$0xff]
    %vm214 = vcmask 130048
    %v216 = vsel %vm214, %v210, 0
    %v219 = vsel %vm214, %v211, 0
    %221 = vmatprep.subr.mxu0 0.0
    %222 = vmatpush1.msra.mxu0 0.0
    %223 = vmatprep.subr.mxu0 0.0
    %224 = vmatpush1.msra.mxu0 0.0
    %225 = vmatprep.subr.mxu0 0.0
    %226 = vmatpush1.msra.mxu0 0.0
    %227 = vmatprep.subr.mxu0 0.0
    %228 = vmatpush1.msra.mxu0 0.0
    %229 = vmatprep.subr.mxu0 0.0
    %230 = vmatpush1.msra.mxu0 0.0
    %231 = vmatprep.subr.mxu0 0.0
    %232 = vmatpush1.msra.mxu0 0.0
    %233 = vmatprep.subr.mxu0 0.0
    %234 = vmatpush1.msra.mxu0 0.0
    %235 = vmatprep.subr.mxu0 0.0
    %236 = vmatpush1.msra.mxu0 0.0
    %237 = vmatprep.subr.mxu0 0.0
    %238 = vmatpush1.msra.mxu0 0.0
    %239 = vmatprep.subr.mxu0 0.0
    %240 = vmatpush1.msra.mxu0 0.0
    %241 = vmatprep.subr.mxu0 0.0
    %242 = vmatpush1.msra.mxu0 0.0
    %243 = vmatprep.subr.mxu0 0.0
    %244 = vmatpush1.msra.mxu0 0.0
    %245 = vmatprep.subr.mxu0 0.0
    %246 = vmatpush1.msra.mxu0 0.0
    %247 = vmatprep.subr.mxu0 0.0
    %248 = vmatpush1.msra.mxu0 0.0
    %249 = vmatprep.subr.mxu0 0.0
    %250 = vmatpush1.msra.mxu0 %v213
    %251 = vmatprep.subr.mxu0 0.0
    %252 = vmatpush1.msra.mxu0 %v212
    %253 = vmatprep.subr.mxu0 0.0
    %254 = vmatpush2.msra.mxu0 0.0
    %255 = vmatprep.subr.mxu0 0.0
    %256 = vmatpush2.msra.mxu0 0.0
    %257 = vmatprep.subr.mxu0 0.0
    %258 = vmatpush2.msra.mxu0 0.0
    %259 = vmatprep.subr.mxu0 0.0
    %260 = vmatpush2.msra.mxu0 0.0
    %261 = vmatprep.subr.mxu0 0.0
    %262 = vmatpush2.msra.mxu0 0.0
    %263 = vmatprep.subr.mxu0 0.0
    %264 = vmatpush2.msra.mxu0 0.0
    %265 = vmatprep.subr.mxu0 0.0
    %266 = vmatpush2.msra.mxu0 0.0
    %267 = vmatprep.subr.mxu0 0.0
    %268 = vmatpush2.msra.mxu0 0.0
    %269 = vmatprep.subr.mxu0 0.0
    %270 = vmatpush2.msra.mxu0 0.0
    %271 = vmatprep.subr.mxu0 0.0
    %272 = vmatpush2.msra.mxu0 0.0
    %273 = vmatprep.subr.mxu0 0.0
    %274 = vmatpush2.msra.mxu0 0.0
    %275 = vmatprep.subr.mxu0 0.0
    %276 = vmatpush2.msra.mxu0 0.0
    %277 = vmatprep.subr.mxu0 0.0
    %278 = vmatpush2.msra.mxu0 0.0
    %279 = vmatprep.subr.mxu0 0.0
    %280 = vmatpush2.msra.mxu0 0.0
    %281 = vmatprep.subr.mxu0 0.0
    %282 = vmatpush2.msra.mxu0 0.0
    %283 = vmatprep.subr.mxu0 0.0
    %284 = vmatpush2.msra.mxu0 0.0
    %285 = vmatprep.mubr.f32.mxu0 0.0
    %286 = vmatmul.mubr.f32.gmra.mxu0 %v216
    %v287 = vpop.f32.mrf.mxu0
    %v288 = vadd.f32 0.0, %v287
    %v289 = vpop.f32.mrf.mxu0
    %290 = vmatprep.mubr.f32.mxu0 0.0
    %291 = vmatmul.mubr.f32.gmra.mxu0 %v219
    %v292 = vpop.f32.mrf.mxu0
    %v293 = vadd.f32 0.0, %v292
    %v294 = vpop.f32.mrf.mxu0
    %295 = vdwg.mxu0
    %v296 = vld [vmem:[#allocation6] sm:$0xff]
    %v297 = vld [vmem:[#allocation6 + $0x8] sm:$0xff]
    %v298 = vld [vmem:[#allocation6 + $0x10] sm:$0xff]
    %v299 = vld [vmem:[#allocation10] sm:$0xff]
    %v300 = vld [vmem:[#allocation10 + $0x8] sm:$0xff]
    %v301 = vld [vmem:[#allocation10 + $0x10] sm:$0xff]
    %v303 = vsel %vm120, %v296, 0
    %v306 = vsel %vm120, %v297, 0
    %v309 = vsel %vm120, %v298, 0
    %311 = vmatprep.subr.mxu0 0.0
    %312 = vmatpush1.msra.mxu0 0.0
    %313 = vmatprep.subr.mxu0 0.0
    %314 = vmatpush1.msra.mxu0 0.0
    %315 = vmatprep.subr.mxu0 0.0
    %316 = vmatpush1.msra.mxu0 0.0
    %317 = vmatprep.subr.mxu0 0.0
    %318 = vmatpush1.msra.mxu0 0.0
    %319 = vmatprep.subr.mxu0 0.0
    %320 = vmatpush1.msra.mxu0 0.0
    %321 = vmatprep.subr.mxu0 0.0
    %322 = vmatpush1.msra.mxu0 0.0
    %323 = vmatprep.subr.mxu0 0.0
    %324 = vmatpush1.msra.mxu0 0.0
    %325 = vmatprep.subr.mxu0 0.0
    %326 = vmatpush1.msra.mxu0 0.0
    %327 = vmatprep.subr.mxu0 0.0
    %328 = vmatpush1.msra.mxu0 0.0
    %329 = vmatprep.subr.mxu0 0.0
    %330 = vmatpush1.msra.mxu0 0.0
    %331 = vmatprep.subr.mxu0 0.0
    %332 = vmatpush1.msra.mxu0 0.0
    %333 = vmatprep.subr.mxu0 0.0
    %334 = vmatpush1.msra.mxu0 0.0
    %335 = vmatprep.subr.mxu0 0.0
    %336 = vmatpush1.msra.mxu0 0.0
    %337 = vmatprep.subr.mxu0 0.0
    %338 = vmatpush1.msra.mxu0 %v301
    %339 = vmatprep.subr.mxu0 0.0
    %340 = vmatpush1.msra.mxu0 %v300
    %341 = vmatprep.subr.mxu0 0.0
    %342 = vmatpush1.msra.mxu0 %v299
    %343 = vmatprep.subr.mxu0 0.0
    %344 = vmatpush2.msra.mxu0 0.0
    %345 = vmatprep.subr.mxu0 0.0
    %346 = vmatpush2.msra.mxu0 0.0
    %347 = vmatprep.subr.mxu0 0.0
    %348 = vmatpush2.msra.mxu0 0.0
    %349 = vmatprep.subr.mxu0 0.0
    %350 = vmatpush2.msra.mxu0 0.0
    %351 = vmatprep.subr.mxu0 0.0
    %352 = vmatpush2.msra.mxu0 0.0
    %353 = vmatprep.subr.mxu0 0.0
    %354 = vmatpush2.msra.mxu0 0.0
    %355 = vmatprep.subr.mxu0 0.0
    %356 = vmatpush2.msra.mxu0 0.0
    %357 = vmatprep.subr.mxu0 0.0
    %358 = vmatpush2.msra.mxu0 0.0
    %359 = vmatprep.subr.mxu0 0.0
    %360 = vmatpush2.msra.mxu0 0.0
    %361 = vmatprep.subr.mxu0 0.0
    %362 = vmatpush2.msra.mxu0 0.0
    %363 = vmatprep.subr.mxu0 0.0
    %364 = vmatpush2.msra.mxu0 0.0
    %365 = vmatprep.subr.mxu0 0.0
    %366 = vmatpush2.msra.mxu0 0.0
    %367 = vmatprep.subr.mxu0 0.0
    %368 = vmatpush2.msra.mxu0 0.0
    %369 = vmatprep.subr.mxu0 0.0
    %370 = vmatpush2.msra.mxu0 0.0
    %371 = vmatprep.subr.mxu0 0.0
    %372 = vmatpush2.msra.mxu0 0.0
    %373 = vmatprep.subr.mxu0 0.0
    %374 = vmatpush2.msra.mxu0 0.0
    %375 = vmatprep.mubr.f32.mxu0 0.0
    %376 = vmatmul.mubr.f32.gmra.mxu0 %v303
    %v377 = vpop.f32.mrf.mxu0
    %v378 = vadd.f32 0.0, %v377
    %v379 = vpop.f32.mrf.mxu0
    %380 = vmatprep.mubr.f32.mxu0 0.0
    %381 = vmatmul.mubr.f32.gmra.mxu0 %v306
    %v382 = vpop.f32.mrf.mxu0
    %v383 = vadd.f32 0.0, %v382
    %v384 = vpop.f32.mrf.mxu0
    %385 = vmatprep.mubr.f32.mxu0 0.0
    %386 = vmatmul.mubr.f32.gmra.mxu0 %v309
    %v387 = vpop.f32.mrf.mxu0
    %v388 = vadd.f32 0.0, %v387
    %v389 = vpop.f32.mrf.mxu0
    %390 = vdwg.mxu0
    %v391 = vld [vmem:[%s6] sm:$0xff]
    %v392 = vld [vmem:[%s6 + $0x8] sm:$0xff]
    %v393 = vld [vmem:[%s6 + $0x10] sm:$0xff]
    %v394 = vld [vmem:[%s6 + $0x18] sm:$0xff]
    %v395 = vld [vmem:[%s6 + $0x20] sm:$0xff]
    %v396 = vld [vmem:[%s6 + $0x28] sm:$0xff]
    %v397 = vld [vmem:[%s6 + $0x30] sm:$0xff]
    %v398 = vld [vmem:[%s6 + $0x38] sm:$0xff]
    %v399 = vadd.f32 %v197, %v391
    %v400 = vadd.f32 %v202, %v392
    %v401 = vadd.f32 %v207, %v393
    %v402 = vadd.f32 %v288, %v394
    %v403 = vadd.f32 %v293, %v395
    %v404 = vadd.f32 %v378, %v396
    %v405 = vadd.f32 %v383, %v397
    %v406 = vadd.f32 %v388, %v398
    %v407 = vxor.u32 %v399, 2147483648
    %v408 = vxor.u32 %v400, 2147483648
    %v409 = vxor.u32 %v401, 2147483648
    %v410 = vxor.u32 %v402, 2147483648
    %v411 = vxor.u32 %v403, 2147483648
    %v412 = vxor.u32 %v404, 2147483648
    %v413 = vxor.u32 %v405, 2147483648
    %v414 = vxor.u32 %v406, 2147483648
    %v415 = vmul.f32 %v407, 1.442695
    %v416 = vpow.pop %v415
    %v417 = vmul.f32 %v408, 1.442695
    %v418 = vpow.pop %v417
    %v419 = vmul.f32 %v409, 1.442695
    %v420 = vpow.pop %v419
    %v421 = vmul.f32 %v410, 1.442695
    %v422 = vpow.pop %v421
    %v423 = vmul.f32 %v411, 1.442695
    %v424 = vpow.pop %v423
    %v425 = vmul.f32 %v412, 1.442695
    %v426 = vpow.pop %v425
    %v427 = vmul.f32 %v413, 1.442695
    %v428 = vpow.pop %v427
    %v429 = vmul.f32 %v414, 1.442695
    %v430 = vpow.pop %v429
    %v431 = vadd.f32 %v416, 1.0
    %v432 = vadd.f32 %v418, 1.0
    %v433 = vadd.f32 %v420, 1.0
    %v434 = vadd.f32 %v422, 1.0
    %v435 = vadd.f32 %v424, 1.0
    %v436 = vadd.f32 %v426, 1.0
    %v437 = vadd.f32 %v428, 1.0
    %v438 = vadd.f32 %v430, 1.0
    %v439 = vrcp.pop %v431
    %v440 = vmul.f32 1.0, %v439
    %v441 = vrcp.pop %v432
    %v442 = vmul.f32 1.0, %v441
    %v443 = vrcp.pop %v433
    %v444 = vmul.f32 1.0, %v443
    %v445 = vrcp.pop %v434
    %v446 = vmul.f32 1.0, %v445
    %v447 = vrcp.pop %v435
    %v448 = vmul.f32 1.0, %v447
    %v449 = vrcp.pop %v436
    %v450 = vmul.f32 1.0, %v449
    %v451 = vrcp.pop %v437
    %v452 = vmul.f32 1.0, %v451
    %v453 = vrcp.pop %v438
    %v454 = vmul.f32 1.0, %v453
    %v455 = vld [vmem:[%s7] sm:$0xff]
    %v456 = vld [vmem:[%s7 + $0x8] sm:$0xff]
    %v457 = vld [vmem:[%s7 + $0x10] sm:$0xff]
    %v458 = vld [vmem:[%s7 + $0x18] sm:$0xff]
    %v459 = vld [vmem:[%s7 + $0x20] sm:$0xff]
    %v460 = vld [vmem:[%s7 + $0x28] sm:$0xff]
    %v461 = vld [vmem:[%s7 + $0x30] sm:$0xff]
    %v462 = vld [vmem:[%s7 + $0x38] sm:$0xff]
    %vm463 = vcmask 523264
    %v464 = vsel %vm463, %v455, 0.0
    %465 = vadd.xlane.f32.xlu0 %v464
    %v466 = vpop.xlane.xlu0 %465
    %v467 = vsel %vm463, %v456, 0.0
    %468 = vadd.xlane.f32.xlu0 %v467
    %v469 = vpop.xlane.xlu0 %468
    %v470 = vsel %vm463, %v457, 0.0
    %471 = vadd.xlane.f32.xlu0 %v470
    %v472 = vpop.xlane.xlu0 %471
    %v473 = vsel %vm463, %v458, 0.0
    %474 = vadd.xlane.f32.xlu0 %v473
    %v475 = vpop.xlane.xlu0 %474
    %v476 = vsel %vm463, %v459, 0.0
    %477 = vadd.xlane.f32.xlu0 %v476
    %v478 = vpop.xlane.xlu0 %477
    %v479 = vsel %vm463, %v460, 0.0
    %480 = vadd.xlane.f32.xlu0 %v479
    %v481 = vpop.xlane.xlu0 %480
    %v482 = vsel %vm463, %v461, 0.0
    %483 = vadd.xlane.f32.xlu0 %v482
    %v484 = vpop.xlane.xlu0 %483
    %v485 = vsel %vm463, %v462, 0.0
    %486 = vadd.xlane.f32.xlu0 %v485
    %v487 = vpop.xlane.xlu0 %486
    %v488 = vadd.f32 %v464, %v467
    %v489 = vadd.f32 %v488, %v470
    %v490 = vadd.f32 %v489, %v473
    %v491 = vadd.f32 %v490, %v476
    %v492 = vadd.f32 %v491, %v479
    %v493 = vadd.f32 %v492, %v482
    %v494 = vadd.f32 %v493, %v485
    %v495 = vrot.slane %v494, 4
    %v496 = vadd.f32 %v494, %v495
    %v497 = vrot.slane %v496, 2
    %v498 = vadd.f32 %v496, %v497
    %v499 = vrot.slane %v498, 1
    %v500 = vadd.f32 %v498, %v499
    %vm501 = vcmp.gt.f32.partialorder %v466, 0.0
    %vm502 = vcmp.gt.f32.partialorder %v469, 0.0
    %vm503 = vcmp.gt.f32.partialorder %v472, 0.0
    %vm504 = vcmp.gt.f32.partialorder %v475, 0.0
    %vm505 = vcmp.gt.f32.partialorder %v478, 0.0
    %vm506 = vcmp.gt.f32.partialorder %v481, 0.0
    %vm507 = vcmp.gt.f32.partialorder %v484, 0.0
    %vm508 = vcmp.gt.f32.partialorder %v487, 0.0
    %v509 = vmax.f32 %v466, 1e-12
    %v510 = vmax.f32 %v469, 1e-12
    %v511 = vmax.f32 %v472, 1e-12
    %v512 = vmax.f32 %v475, 1e-12
    %v513 = vmax.f32 %v478, 1e-12
    %v514 = vmax.f32 %v481, 1e-12
    %v515 = vmax.f32 %v484, 1e-12
    %v516 = vmax.f32 %v487, 1e-12
    %v517 = vrsqrt.pop %v509
    %v518 = vrsqrt.pop %v510
    %v519 = vrsqrt.pop %v511
    %v520 = vrsqrt.pop %v512
    %v521 = vrsqrt.pop %v513
    %v522 = vrsqrt.pop %v514
    %v523 = vrsqrt.pop %v515
    %v524 = vrsqrt.pop %v516
    %v525 = vsel %vm501, %v517, 0.0
    %v526 = vsel %vm502, %v518, 0.0
    %v527 = vsel %vm503, %v519, 0.0
    %v528 = vsel %vm504, %v520, 0.0
    %v529 = vsel %vm505, %v521, 0.0
    %v530 = vsel %vm506, %v522, 0.0
    %v531 = vsel %vm507, %v523, 0.0
    %v532 = vsel %vm508, %v524, 0.0
    %vm533 = vcmp.gt.f32.partialorder %v500, 0.0
    %v534 = vmax.f32 %v500, 1e-12
    %v535 = vrsqrt.pop %v534
    %v536 = vsel %vm533, %v535, 0.0
    %v537 = vmul.f32 %v525, %v455
    %v538 = vmul.f32 %v526, %v456
    %v539 = vmul.f32 %v527, %v457
    %v540 = vmul.f32 %v528, %v458
    %v541 = vmul.f32 %v529, %v459
    %v542 = vmul.f32 %v530, %v460
    %v543 = vmul.f32 %v531, %v461
    %v544 = vmul.f32 %v532, %v462
    %v545 = vmul.f32 %v537, %v536
    %v546 = vmul.f32 %v538, %v536
    %v547 = vmul.f32 %v539, %v536
    %v548 = vmul.f32 %v540, %v536
    %v549 = vmul.f32 %v541, %v536
    %v550 = vmul.f32 %v542, %v536
    %v551 = vmul.f32 %v543, %v536
    %v552 = vmul.f32 %v544, %v536
    %v553 = vld [vmem:[%s8] sm:$0xff]
    %v554 = vld [vmem:[%s8 + $0x8] sm:$0xff]
    %v555 = vld [vmem:[%s8 + $0x10] sm:$0xff]
    %v556 = vld [vmem:[%s8 + $0x18] sm:$0xff]
    %v557 = vmul.f32 %v440, %v440
    %v558 = vmul.f32 %v442, %v442
    %v559 = vmul.f32 %v444, %v444
    %v560 = vmul.f32 %v446, %v446
    %v561 = vmul.f32 %v448, %v448
    %vm562 = vcmask 261120
    %v563 = vsel %vm562, %v557, 0.0
    %564 = vadd.xlane.f32.xlu0 %v563
    %v565 = vpop.xlane.xlu0 %564
    %v566 = vsel %vm562, %v558, 0.0
    %567 = vadd.xlane.f32.xlu0 %v566
    %v568 = vpop.xlane.xlu0 %567
    %v569 = vsel %vm562, %v559, 0.0
    %570 = vadd.xlane.f32.xlu0 %v569
    %v571 = vpop.xlane.xlu0 %570
    %v572 = vsel %vm562, %v560, 0.0
    %573 = vadd.xlane.f32.xlu0 %v572
    %v574 = vpop.xlane.xlu0 %573
    %v575 = vsel %vm562, %v561, 0.0
    %576 = vadd.xlane.f32.xlu0 %v575
    %v577 = vpop.xlane.xlu0 %576
    %v579 = vsel %vm562, %v440, 0
    %v582 = vsel %vm562, %v442, 0
    %v585 = vsel %vm562, %v444, 0
    %v588 = vsel %vm562, %v446, 0
    %v591 = vsel %vm562, %v448, 0
    %v594 = vsel %vm562, %v450, 0
    %v597 = vsel %vm562, %v452, 0
    %v600 = vsel %vm562, %v454, 0
    %602 = vmatprep.subr.mxu0 0.0
    %603 = vmatpush1.msra.mxu0 0.0
    %604 = vmatprep.subr.mxu0 0.0
    %605 = vmatpush1.msra.mxu0 0.0
    %606 = vmatprep.subr.mxu0 0.0
    %607 = vmatpush1.msra.mxu0 0.0
    %608 = vmatprep.subr.mxu0 0.0
    %609 = vmatpush1.msra.mxu0 0.0
    %610 = vmatprep.subr.mxu0 0.0
    %611 = vmatpush1.msra.mxu0 0.0
    %612 = vmatprep.subr.mxu0 0.0
    %613 = vmatpush1.msra.mxu0 0.0
    %614 = vmatprep.subr.mxu0 0.0
    %615 = vmatpush1.msra.mxu0 0.0
    %616 = vmatprep.subr.mxu0 0.0
    %617 = vmatpush1.msra.mxu0 0.0
    %618 = vmatprep.subr.mxu0 0.0
    %619 = vmatpush1.msra.mxu0 0.0
    %620 = vmatprep.subr.mxu0 0.0
    %621 = vmatpush1.msra.mxu0 0.0
    %622 = vmatprep.subr.mxu0 0.0
    %623 = vmatpush1.msra.mxu0 0.0
    %624 = vmatprep.subr.mxu0 0.0
    %625 = vmatpush1.msra.mxu0 0.0
    %626 = vmatprep.subr.mxu0 0.0
    %627 = vmatpush1.msra.mxu0 %v556
    %628 = vmatprep.subr.mxu0 0.0
    %629 = vmatpush1.msra.mxu0 %v555
    %630 = vmatprep.subr.mxu0 0.0
    %631 = vmatpush1.msra.mxu0 %v554
    %632 = vmatprep.subr.mxu0 0.0
    %633 = vmatpush1.msra.mxu0 %v553
    %634 = vmatprep.subr.mxu0 0.0
    %635 = vmatpush2.msra.mxu0 0.0
    %636 = vmatprep.subr.mxu0 0.0
    %637 = vmatpush2.msra.mxu0 0.0
    %638 = vmatprep.subr.mxu0 0.0
    %639 = vmatpush2.msra.mxu0 0.0
    %640 = vmatprep.subr.mxu0 0.0
    %641 = vmatpush2.msra.mxu0 0.0
    %642 = vmatprep.subr.mxu0 0.0
    %643 = vmatpush2.msra.mxu0 0.0
    %644 = vmatprep.subr.mxu0 0.0
    %645 = vmatpush2.msra.mxu0 0.0
    %646 = vmatprep.subr.mxu0 0.0
    %647 = vmatpush2.msra.mxu0 0.0
    %648 = vmatprep.subr.mxu0 0.0
    %649 = vmatpush2.msra.mxu0 0.0
    %650 = vmatprep.subr.mxu0 0.0
    %651 = vmatpush2.msra.mxu0 0.0
    %652 = vmatprep.subr.mxu0 0.0
    %653 = vmatpush2.msra.mxu0 0.0
    %654 = vmatprep.subr.mxu0 0.0
    %655 = vmatpush2.msra.mxu0 0.0
    %656 = vmatprep.subr.mxu0 0.0
    %657 = vmatpush2.msra.mxu0 0.0
    %658 = vmatprep.subr.mxu0 0.0
    %659 = vmatpush2.msra.mxu0 0.0
    %660 = vmatprep.subr.mxu0 0.0
    %661 = vmatpush2.msra.mxu0 0.0
    %662 = vmatprep.subr.mxu0 0.0
    %663 = vmatpush2.msra.mxu0 0.0
    %664 = vmatprep.subr.mxu0 0.0
    %665 = vmatpush2.msra.mxu0 0.0
    %666 = vmatprep.mubr.f32.mxu0 0.0
    %667 = vmatmul.mubr.f32.gmra.mxu0 %v579
    %v668 = vpop.f32.mrf.mxu0
    %v669 = vadd.f32 0.0, %v668
    %v670 = vpop.f32.mrf.mxu0
    %671 = vmatprep.mubr.f32.mxu0 0.0
    %672 = vmatmul.mubr.f32.gmra.mxu0 %v582
    %v673 = vpop.f32.mrf.mxu0
    %v674 = vadd.f32 0.0, %v673
    %v675 = vpop.f32.mrf.mxu0
    %676 = vmatprep.mubr.f32.mxu0 0.0
    %677 = vmatmul.mubr.f32.gmra.mxu0 %v585
    %v678 = vpop.f32.mrf.mxu0
    %v679 = vadd.f32 0.0, %v678
    %v680 = vpop.f32.mrf.mxu0
    %681 = vmatprep.mubr.f32.mxu0 0.0
    %682 = vmatmul.mubr.f32.gmra.mxu0 %v588
    %v683 = vpop.f32.mrf.mxu0
    %v684 = vadd.f32 0.0, %v683
    %v685 = vpop.f32.mrf.mxu0
    %686 = vmatprep.mubr.f32.mxu0 0.0
    %687 = vmatmul.mubr.f32.gmra.mxu0 %v591
    %v688 = vpop.f32.mrf.mxu0
    %v689 = vadd.f32 0.0, %v688
    %v690 = vpop.f32.mrf.mxu0
    %691 = vmatprep.mubr.f32.mxu0 0.0
    %692 = vmatmul.mubr.f32.gmra.mxu0 %v594
    %v693 = vpop.f32.mrf.mxu0
    %v694 = vadd.f32 0.0, %v693
    %v695 = vpop.f32.mrf.mxu0
    %696 = vmatprep.mubr.f32.mxu0 0.0
    %697 = vmatmul.mubr.f32.gmra.mxu0 %v597
    %v698 = vpop.f32.mrf.mxu0
    %v699 = vadd.f32 0.0, %v698
    %v700 = vpop.f32.mrf.mxu0
    %701 = vmatprep.mubr.f32.mxu0 0.0
    %702 = vmatmul.mubr.f32.gmra.mxu0 %v600
    %v703 = vpop.f32.mrf.mxu0
    %v704 = vadd.f32 0.0, %v703
    %v705 = vpop.f32.mrf.mxu0
    %706 = vdwg.mxu0
    %v708 = vsel %vm463, %v545, 0
    %v711 = vsel %vm463, %v546, 0
    %v714 = vsel %vm463, %v547, 0
    %v717 = vsel %vm463, %v548, 0
    %v720 = vsel %vm463, %v549, 0
    %v723 = vsel %vm463, %v550, 0
    %v726 = vsel %vm463, %v551, 0
    %v729 = vsel %vm463, %v552, 0
    %731 = vmatprep.subr.mxu0 0.0
    %732 = vmatpush1.msra.mxu0 0.0
    %733 = vmatprep.subr.mxu0 0.0
    %734 = vmatpush1.msra.mxu0 0.0
    %735 = vmatprep.subr.mxu0 0.0
    %736 = vmatpush1.msra.mxu0 0.0
    %737 = vmatprep.subr.mxu0 0.0
    %738 = vmatpush1.msra.mxu0 0.0
    %739 = vmatprep.subr.mxu0 0.0
    %740 = vmatpush1.msra.mxu0 0.0
    %741 = vmatprep.subr.mxu0 0.0
    %742 = vmatpush1.msra.mxu0 0.0
    %743 = vmatprep.subr.mxu0 0.0
    %744 = vmatpush1.msra.mxu0 0.0
    %745 = vmatprep.subr.mxu0 0.0
    %746 = vmatpush1.msra.mxu0 0.0
    %747 = vmatprep.subr.mxu0 0.0
    %748 = vmatpush1.msra.mxu0 %v704
    %749 = vmatprep.subr.mxu0 0.0
    %750 = vmatpush1.msra.mxu0 %v699
    %751 = vmatprep.subr.mxu0 0.0
    %752 = vmatpush1.msra.mxu0 %v694
    %753 = vmatprep.subr.mxu0 0.0
    %754 = vmatpush1.msra.mxu0 %v689
    %755 = vmatprep.subr.mxu0 0.0
    %756 = vmatpush1.msra.mxu0 %v684
    %757 = vmatprep.subr.mxu0 0.0
    %758 = vmatpush1.msra.mxu0 %v679
    %759 = vmatprep.subr.mxu0 0.0
    %760 = vmatpush1.msra.mxu0 %v674
    %761 = vmatprep.subr.mxu0 0.0
    %762 = vmatpush1.msra.mxu0 %v669
    %763 = vmatprep.subr.mxu0 0.0
    %764 = vmatpush2.msra.mxu0 0.0
    %765 = vmatprep.subr.mxu0 0.0
    %766 = vmatpush2.msra.mxu0 0.0
    %767 = vmatprep.subr.mxu0 0.0
    %768 = vmatpush2.msra.mxu0 0.0
    %769 = vmatprep.subr.mxu0 0.0
    %770 = vmatpush2.msra.mxu0 0.0
    %771 = vmatprep.subr.mxu0 0.0
    %772 = vmatpush2.msra.mxu0 0.0
    %773 = vmatprep.subr.mxu0 0.0
    %774 = vmatpush2.msra.mxu0 0.0
    %775 = vmatprep.subr.mxu0 0.0
    %776 = vmatpush2.msra.mxu0 0.0
    %777 = vmatprep.subr.mxu0 0.0
    %778 = vmatpush2.msra.mxu0 0.0
    %779 = vmatprep.subr.mxu0 0.0
    %780 = vmatpush2.msra.mxu0 0.0
    %781 = vmatprep.subr.mxu0 0.0
    %782 = vmatpush2.msra.mxu0 0.0
    %783 = vmatprep.subr.mxu0 0.0
    %784 = vmatpush2.msra.mxu0 0.0
    %785 = vmatprep.subr.mxu0 0.0
    %786 = vmatpush2.msra.mxu0 0.0
    %787 = vmatprep.subr.mxu0 0.0
    %788 = vmatpush2.msra.mxu0 0.0
    %789 = vmatprep.subr.mxu0 0.0
    %790 = vmatpush2.msra.mxu0 0.0
    %791 = vmatprep.subr.mxu0 0.0
    %792 = vmatpush2.msra.mxu0 0.0
    %793 = vmatprep.subr.mxu0 0.0
    %794 = vmatpush2.msra.mxu0 0.0
    %795 = vmatprep.mubr.f32.mxu0 0.0
    %796 = vmatmul.mubr.f32.gmra.mxu0 %v708
    %v797 = vpop.f32.mrf.mxu0
    %v798 = vadd.f32 0.0, %v797
    %v799 = vpop.f32.mrf.mxu0
    %800 = vmatprep.mubr.f32.mxu0 0.0
    %801 = vmatmul.mubr.f32.gmra.mxu0 %v711
    %v802 = vpop.f32.mrf.mxu0
    %v803 = vadd.f32 0.0, %v802
    %v804 = vpop.f32.mrf.mxu0
    %805 = vmatprep.mubr.f32.mxu0 0.0
    %806 = vmatmul.mubr.f32.gmra.mxu0 %v714
    %v807 = vpop.f32.mrf.mxu0
    %v808 = vadd.f32 0.0, %v807
    %v809 = vpop.f32.mrf.mxu0
    %810 = vmatprep.mubr.f32.mxu0 0.0
    %811 = vmatmul.mubr.f32.gmra.mxu0 %v717
    %v812 = vpop.f32.mrf.mxu0
    %v813 = vadd.f32 0.0, %v812
    %v814 = vpop.f32.mrf.mxu0
    %815 = vmatprep.mubr.f32.mxu0 0.0
    %816 = vmatmul.mubr.f32.gmra.mxu0 %v720
    %v817 = vpop.f32.mrf.mxu0
    %v818 = vadd.f32 0.0, %v817
    %v819 = vpop.f32.mrf.mxu0
    %820 = vmatprep.mubr.f32.mxu0 0.0
    %821 = vmatmul.mubr.f32.gmra.mxu0 %v723
    %v822 = vpop.f32.mrf.mxu0
    %v823 = vadd.f32 0.0, %v822
    %v824 = vpop.f32.mrf.mxu0
    %825 = vmatprep.mubr.f32.mxu0 0.0
    %826 = vmatmul.mubr.f32.gmra.mxu0 %v726
    %v827 = vpop.f32.mrf.mxu0
    %v828 = vadd.f32 0.0, %v827
    %v829 = vpop.f32.mrf.mxu0
    %830 = vmatprep.mubr.f32.mxu0 0.0
    %831 = vmatmul.mubr.f32.gmra.mxu0 %v729
    %v832 = vpop.f32.mrf.mxu0
    %v833 = vadd.f32 0.0, %v832
    %v834 = vpop.f32.mrf.mxu0
    %835 = vdwg.mxu0
    %v836 = vmax.f32 %v798, 0.0
    %v837 = vmax.f32 %v803, 0.0
    %v838 = vmax.f32 %v808, 0.0
    %v839 = vmax.f32 %v813, 0.0
    %v840 = vmax.f32 %v818, 0.0
    %v841 = vmax.f32 %v823, 0.0
    %v842 = vmax.f32 %v828, 0.0
    %v843 = vmax.f32 %v833, 0.0
    %v844 = vmul.f32 %v836, %v836
    %v845 = vmul.f32 %v837, %v837
    %v846 = vmul.f32 %v838, %v838
    %v847 = vmul.f32 %v839, %v839
    %v848 = vmul.f32 %v840, %v840
    %v849 = vsel %vm562, %v844, 0.0
    %850 = vadd.xlane.f32.xlu0 %v849
    %v851 = vpop.xlane.xlu0 %850
    %v852 = vsel %vm562, %v845, 0.0
    %853 = vadd.xlane.f32.xlu0 %v852
    %v854 = vpop.xlane.xlu0 %853
    %v855 = vsel %vm562, %v846, 0.0
    %856 = vadd.xlane.f32.xlu0 %v855
    %v857 = vpop.xlane.xlu0 %856
    %v858 = vsel %vm562, %v847, 0.0
    %859 = vadd.xlane.f32.xlu0 %v858
    %v860 = vpop.xlane.xlu0 %859
    %v861 = vsel %vm562, %v848, 0.0
    %862 = vadd.xlane.f32.xlu0 %v861
    %v863 = vpop.xlane.xlu0 %862
    %v864 = vmul.f32 %v836, %v440
    %v865 = vmul.f32 %v837, %v442
    %v866 = vmul.f32 %v838, %v444
    %v867 = vmul.f32 %v839, %v446
    %v868 = vmul.f32 %v840, %v448
    %v869 = vsel %vm562, %v864, 0.0
    %870 = vadd.xlane.f32.xlu0 %v869
    %v871 = vpop.xlane.xlu0 %870
    %v872 = vsel %vm562, %v865, 0.0
    %873 = vadd.xlane.f32.xlu0 %v872
    %v874 = vpop.xlane.xlu0 %873
    %v875 = vsel %vm562, %v866, 0.0
    %876 = vadd.xlane.f32.xlu0 %v875
    %v877 = vpop.xlane.xlu0 %876
    %v878 = vsel %vm562, %v867, 0.0
    %879 = vadd.xlane.f32.xlu0 %v878
    %v880 = vpop.xlane.xlu0 %879
    %v881 = vsel %vm562, %v868, 0.0
    %882 = vadd.xlane.f32.xlu0 %v881
    %v883 = vpop.xlane.xlu0 %882
    %v884 = vmul.f32 %v851, %v565
    %v885 = vmul.f32 %v854, %v568
    %v886 = vmul.f32 %v857, %v571
    %v887 = vmul.f32 %v860, %v574
    %v888 = vmul.f32 %v863, %v577
    %v889 = vmax.f32 %v884, 1e-16
    %v890 = vmax.f32 %v885, 1e-16
    %v891 = vmax.f32 %v886, 1e-16
    %v892 = vmax.f32 %v887, 1e-16
    %v893 = vmax.f32 %v888, 1e-16
    %v894 = vrsqrt.pop %v889
    %v895 = vrsqrt.pop %v890
    %v896 = vrsqrt.pop %v891
    %v897 = vrsqrt.pop %v892
    %v898 = vrsqrt.pop %v893
    %v899 = vmul.f32 %v871, %v894
    %v900 = vmul.f32 %v874, %v895
    %v901 = vmul.f32 %v877, %v896
    %v902 = vmul.f32 %v880, %v897
    %v903 = vmul.f32 %v883, %v898
    %v904 = vmul.f32 %v899, %v836
    %v905 = vmul.f32 %v900, %v837
    %v906 = vmul.f32 %v901, %v838
    %v907 = vmul.f32 %v902, %v839
    %v908 = vmul.f32 %v903, %v840
    %v909 = vadd.f32 %v904, 0.0
    %v910 = vadd.f32 %v905, 0.0
    %v911 = vadd.f32 %v906, 0.0
    %v912 = vadd.f32 %v907, 0.0
    %v913 = vadd.f32 %v908, 0.0
    %v915 = vsel %vm562, %v836, 0
    %v918 = vsel %vm562, %v837, 0
    %v921 = vsel %vm562, %v838, 0
    %v924 = vsel %vm562, %v839, 0
    %v927 = vsel %vm562, %v840, 0
    %v930 = vsel %vm562, %v841, 0
    %v933 = vsel %vm562, %v842, 0
    %v936 = vsel %vm562, %v843, 0
    %938 = vmatprep.subr.mxu0 0.0
    %939 = vmatpush1.msra.mxu0 0.0
    %940 = vmatprep.subr.mxu0 0.0
    %941 = vmatpush1.msra.mxu0 0.0
    %942 = vmatprep.subr.mxu0 0.0
    %943 = vmatpush1.msra.mxu0 0.0
    %944 = vmatprep.subr.mxu0 0.0
    %945 = vmatpush1.msra.mxu0 0.0
    %946 = vmatprep.subr.mxu0 0.0
    %947 = vmatpush1.msra.mxu0 0.0
    %948 = vmatprep.subr.mxu0 0.0
    %949 = vmatpush1.msra.mxu0 0.0
    %950 = vmatprep.subr.mxu0 0.0
    %951 = vmatpush1.msra.mxu0 0.0
    %952 = vmatprep.subr.mxu0 0.0
    %953 = vmatpush1.msra.mxu0 0.0
    %954 = vmatprep.subr.mxu0 0.0
    %955 = vmatpush1.msra.mxu0 0.0
    %956 = vmatprep.subr.mxu0 0.0
    %957 = vmatpush1.msra.mxu0 0.0
    %958 = vmatprep.subr.mxu0 0.0
    %959 = vmatpush1.msra.mxu0 0.0
    %960 = vmatprep.subr.mxu0 0.0
    %961 = vmatpush1.msra.mxu0 0.0
    %962 = vmatprep.subr.mxu0 0.0
    %963 = vmatpush1.msra.mxu0 %v556
    %964 = vmatprep.subr.mxu0 0.0
    %965 = vmatpush1.msra.mxu0 %v555
    %966 = vmatprep.subr.mxu0 0.0
    %967 = vmatpush1.msra.mxu0 %v554
    %968 = vmatprep.subr.mxu0 0.0
    %969 = vmatpush1.msra.mxu0 %v553
    %970 = vmatprep.subr.mxu0 0.0
    %971 = vmatpush2.msra.mxu0 0.0
    %972 = vmatprep.subr.mxu0 0.0
    %973 = vmatpush2.msra.mxu0 0.0
    %974 = vmatprep.subr.mxu0 0.0
    %975 = vmatpush2.msra.mxu0 0.0
    %976 = vmatprep.subr.mxu0 0.0
    %977 = vmatpush2.msra.mxu0 0.0
    %978 = vmatprep.subr.mxu0 0.0
    %979 = vmatpush2.msra.mxu0 0.0
    %980 = vmatprep.subr.mxu0 0.0
    %981 = vmatpush2.msra.mxu0 0.0
    %982 = vmatprep.subr.mxu0 0.0
    %983 = vmatpush2.msra.mxu0 0.0
    %984 = vmatprep.subr.mxu0 0.0
    %985 = vmatpush2.msra.mxu0 0.0
    %986 = vmatprep.subr.mxu0 0.0
    %987 = vmatpush2.msra.mxu0 0.0
    %988 = vmatprep.subr.mxu0 0.0
    %989 = vmatpush2.msra.mxu0 0.0
    %990 = vmatprep.subr.mxu0 0.0
    %991 = vmatpush2.msra.mxu0 0.0
    %992 = vmatprep.subr.mxu0 0.0
    %993 = vmatpush2.msra.mxu0 0.0
    %994 = vmatprep.subr.mxu0 0.0
    %995 = vmatpush2.msra.mxu0 0.0
    %996 = vmatprep.subr.mxu0 0.0
    %997 = vmatpush2.msra.mxu0 0.0
    %998 = vmatprep.subr.mxu0 0.0
    %999 = vmatpush2.msra.mxu0 0.0
    %1000 = vmatprep.subr.mxu0 0.0
    %1001 = vmatpush2.msra.mxu0 0.0
    %1002 = vmatprep.mubr.f32.mxu0 0.0
    %1003 = vmatmul.mubr.f32.gmra.mxu0 %v915
    %v1004 = vpop.f32.mrf.mxu0
    %v1005 = vadd.f32 0.0, %v1004
    %v1006 = vpop.f32.mrf.mxu0
    %1007 = vmatprep.mubr.f32.mxu0 0.0
    %1008 = vmatmul.mubr.f32.gmra.mxu0 %v918
    %v1009 = vpop.f32.mrf.mxu0
    %v1010 = vadd.f32 0.0, %v1009
    %v1011 = vpop.f32.mrf.mxu0
    %1012 = vmatprep.mubr.f32.mxu0 0.0
    %1013 = vmatmul.mubr.f32.gmra.mxu0 %v921
    %v1014 = vpop.f32.mrf.mxu0
    %v1015 = vadd.f32 0.0, %v1014
    %v1016 = vpop.f32.mrf.mxu0
    %1017 = vmatprep.mubr.f32.mxu0 0.0
    %1018 = vmatmul.mubr.f32.gmra.mxu0 %v924
    %v1019 = vpop.f32.mrf.mxu0
    %v1020 = vadd.f32 0.0, %v1019
    %v1021 = vpop.f32.mrf.mxu0
    %1022 = vmatprep.mubr.f32.mxu0 0.0
    %1023 = vmatmul.mubr.f32.gmra.mxu0 %v927
    %v1024 = vpop.f32.mrf.mxu0
    %v1025 = vadd.f32 0.0, %v1024
    %v1026 = vpop.f32.mrf.mxu0
    %1027 = vmatprep.mubr.f32.mxu0 0.0
    %1028 = vmatmul.mubr.f32.gmra.mxu0 %v930
    %v1029 = vpop.f32.mrf.mxu0
    %v1030 = vadd.f32 0.0, %v1029
    %v1031 = vpop.f32.mrf.mxu0
    %1032 = vmatprep.mubr.f32.mxu0 0.0
    %1033 = vmatmul.mubr.f32.gmra.mxu0 %v933
    %v1034 = vpop.f32.mrf.mxu0
    %v1035 = vadd.f32 0.0, %v1034
    %v1036 = vpop.f32.mrf.mxu0
    %1037 = vmatprep.mubr.f32.mxu0 0.0
    %1038 = vmatmul.mubr.f32.gmra.mxu0 %v936
    %v1039 = vpop.f32.mrf.mxu0
    %v1040 = vadd.f32 0.0, %v1039
    %v1041 = vpop.f32.mrf.mxu0
    %1042 = vdwg.mxu0
    %1043 = vmatprep.subr.mxu0 0.0
    %1044 = vmatpush1.msra.mxu0 0.0
    %1045 = vmatprep.subr.mxu0 0.0
    %1046 = vmatpush1.msra.mxu0 0.0
    %1047 = vmatprep.subr.mxu0 0.0
    %1048 = vmatpush1.msra.mxu0 0.0
    %1049 = vmatprep.subr.mxu0 0.0
    %1050 = vmatpush1.msra.mxu0 0.0
    %1051 = vmatprep.subr.mxu0 0.0
    %1052 = vmatpush1.msra.mxu0 0.0
    %1053 = vmatprep.subr.mxu0 0.0
    %1054 = vmatpush1.msra.mxu0 0.0
    %1055 = vmatprep.subr.mxu0 0.0
    %1056 = vmatpush1.msra.mxu0 0.0
    %1057 = vmatprep.subr.mxu0 0.0
    %1058 = vmatpush1.msra.mxu0 0.0
    %1059 = vmatprep.subr.mxu0 0.0
    %1060 = vmatpush1.msra.mxu0 %v1040
    %1061 = vmatprep.subr.mxu0 0.0
    %1062 = vmatpush1.msra.mxu0 %v1035
    %1063 = vmatprep.subr.mxu0 0.0
    %1064 = vmatpush1.msra.mxu0 %v1030
    %1065 = vmatprep.subr.mxu0 0.0
    %1066 = vmatpush1.msra.mxu0 %v1025
    %1067 = vmatprep.subr.mxu0 0.0
    %1068 = vmatpush1.msra.mxu0 %v1020
    %1069 = vmatprep.subr.mxu0 0.0
    %1070 = vmatpush1.msra.mxu0 %v1015
    %1071 = vmatprep.subr.mxu0 0.0
    %1072 = vmatpush1.msra.mxu0 %v1010
    %1073 = vmatprep.subr.mxu0 0.0
    %1074 = vmatpush1.msra.mxu0 %v1005
    %1075 = vmatprep.subr.mxu0 0.0
    %1076 = vmatpush2.msra.mxu0 0.0
    %1077 = vmatprep.subr.mxu0 0.0
    %1078 = vmatpush2.msra.mxu0 0.0
    %1079 = vmatprep.subr.mxu0 0.0
    %1080 = vmatpush2.msra.mxu0 0.0
    %1081 = vmatprep.subr.mxu0 0.0
    %1082 = vmatpush2.msra.mxu0 0.0
    %1083 = vmatprep.subr.mxu0 0.0
    %1084 = vmatpush2.msra.mxu0 0.0
    %1085 = vmatprep.subr.mxu0 0.0
    %1086 = vmatpush2.msra.mxu0 0.0
    %1087 = vmatprep.subr.mxu0 0.0
    %1088 = vmatpush2.msra.mxu0 0.0
    %1089 = vmatprep.subr.mxu0 0.0
    %1090 = vmatpush2.msra.mxu0 0.0
    %1091 = vmatprep.subr.mxu0 0.0
    %1092 = vmatpush2.msra.mxu0 0.0
    %1093 = vmatprep.subr.mxu0 0.0
    %1094 = vmatpush2.msra.mxu0 0.0
    %1095 = vmatprep.subr.mxu0 0.0
    %1096 = vmatpush2.msra.mxu0 0.0
    %1097 = vmatprep.subr.mxu0 0.0
    %1098 = vmatpush2.msra.mxu0 0.0
    %1099 = vmatprep.subr.mxu0 0.0
    %1100 = vmatpush2.msra.mxu0 0.0
    %1101 = vmatprep.subr.mxu0 0.0
    %1102 = vmatpush2.msra.mxu0 0.0
    %1103 = vmatprep.subr.mxu0 0.0
    %1104 = vmatpush2.msra.mxu0 0.0
    %1105 = vmatprep.subr.mxu0 0.0
    %1106 = vmatpush2.msra.mxu0 0.0
    %1107 = vmatprep.mubr.f32.mxu0 0.0
    %1108 = vmatmul.mubr.f32.gmra.mxu0 %v708
    %v1109 = vpop.f32.mrf.mxu0
    %v1110 = vadd.f32 0.0, %v1109
    %v1111 = vpop.f32.mrf.mxu0
    %1112 = vmatprep.mubr.f32.mxu0 0.0
    %1113 = vmatmul.mubr.f32.gmra.mxu0 %v711
    %v1114 = vpop.f32.mrf.mxu0
    %v1115 = vadd.f32 0.0, %v1114
    %v1116 = vpop.f32.mrf.mxu0
    %1117 = vmatprep.mubr.f32.mxu0 0.0
    %1118 = vmatmul.mubr.f32.gmra.mxu0 %v714
    %v1119 = vpop.f32.mrf.mxu0
    %v1120 = vadd.f32 0.0, %v1119
    %v1121 = vpop.f32.mrf.mxu0
    %1122 = vmatprep.mubr.f32.mxu0 0.0
    %1123 = vmatmul.mubr.f32.gmra.mxu0 %v717
    %v1124 = vpop.f32.mrf.mxu0
    %v1125 = vadd.f32 0.0, %v1124
    %v1126 = vpop.f32.mrf.mxu0
    %1127 = vmatprep.mubr.f32.mxu0 0.0
    %1128 = vmatmul.mubr.f32.gmra.mxu0 %v720
    %v1129 = vpop.f32.mrf.mxu0
    %v1130 = vadd.f32 0.0, %v1129
    %v1131 = vpop.f32.mrf.mxu0
    %1132 = vmatprep.mubr.f32.mxu0 0.0
    %1133 = vmatmul.mubr.f32.gmra.mxu0 %v723
    %v1134 = vpop.f32.mrf.mxu0
    %v1135 = vadd.f32 0.0, %v1134
    %v1136 = vpop.f32.mrf.mxu0
    %1137 = vmatprep.mubr.f32.mxu0 0.0
    %1138 = vmatmul.mubr.f32.gmra.mxu0 %v726
    %v1139 = vpop.f32.mrf.mxu0
    %v1140 = vadd.f32 0.0, %v1139
    %v1141 = vpop.f32.mrf.mxu0
    %1142 = vmatprep.mubr.f32.mxu0 0.0
    %1143 = vmatmul.mubr.f32.gmra.mxu0 %v729
    %v1144 = vpop.f32.mrf.mxu0
    %v1145 = vadd.f32 0.0, %v1144
    %v1146 = vpop.f32.mrf.mxu0
    %1147 = vdwg.mxu0
    %v1148 = vmax.f32 %v1110, 0.0
    %v1149 = vmax.f32 %v1115, 0.0
    %v1150 = vmax.f32 %v1120, 0.0
    %v1151 = vmax.f32 %v1125, 0.0
    %v1152 = vmax.f32 %v1130, 0.0
    %v1153 = vmax.f32 %v1135, 0.0
    %v1154 = vmax.f32 %v1140, 0.0
    %v1155 = vmax.f32 %v1145, 0.0
    %v1156 = vmul.f32 %v1148, %v1148
    %v1157 = vmul.f32 %v1149, %v1149
    %v1158 = vmul.f32 %v1150, %v1150
    %v1159 = vmul.f32 %v1151, %v1151
    %v1160 = vmul.f32 %v1152, %v1152
    %v1161 = vsel %vm562, %v1156, 0.0
    %1162 = vadd.xlane.f32.xlu0 %v1161
    %v1163 = vpop.xlane.xlu0 %1162
    %v1164 = vsel %vm562, %v1157, 0.0
    %1165 = vadd.xlane.f32.xlu0 %v1164
    %v1166 = vpop.xlane.xlu0 %1165
    %v1167 = vsel %vm562, %v1158, 0.0
    %1168 = vadd.xlane.f32.xlu0 %v1167
    %v1169 = vpop.xlane.xlu0 %1168
    %v1170 = vsel %vm562, %v1159, 0.0
    %1171 = vadd.xlane.f32.xlu0 %v1170
    %v1172 = vpop.xlane.xlu0 %1171
    %v1173 = vsel %vm562, %v1160, 0.0
    %1174 = vadd.xlane.f32.xlu0 %v1173
    %v1175 = vpop.xlane.xlu0 %1174
    %v1176 = vmul.f32 %v1148, %v440
    %v1177 = vmul.f32 %v1149, %v442
    %v1178 = vmul.f32 %v1150, %v444
    %v1179 = vmul.f32 %v1151, %v446
    %v1180 = vmul.f32 %v1152, %v448
    %v1181 = vsel %vm562, %v1176, 0.0
    %1182 = vadd.xlane.f32.xlu0 %v1181
    %v1183 = vpop.xlane.xlu0 %1182
    %v1184 = vsel %vm562, %v1177, 0.0
    %1185 = vadd.xlane.f32.xlu0 %v1184
    %v1186 = vpop.xlane.xlu0 %1185
    %v1187 = vsel %vm562, %v1178, 0.0
    %1188 = vadd.xlane.f32.xlu0 %v1187
    %v1189 = vpop.xlane.xlu0 %1188
    %v1190 = vsel %vm562, %v1179, 0.0
    %1191 = vadd.xlane.f32.xlu0 %v1190
    %v1192 = vpop.xlane.xlu0 %1191
    %v1193 = vsel %vm562, %v1180, 0.0
    %1194 = vadd.xlane.f32.xlu0 %v1193
    %v1195 = vpop.xlane.xlu0 %1194
    %v1196 = vmul.f32 %v1163, %v565
    %v1197 = vmul.f32 %v1166, %v568
    %v1198 = vmul.f32 %v1169, %v571
    %v1199 = vmul.f32 %v1172, %v574
    %v1200 = vmul.f32 %v1175, %v577
    %v1201 = vmax.f32 %v1196, 1e-16
    %v1202 = vmax.f32 %v1197, 1e-16
    %v1203 = vmax.f32 %v1198, 1e-16
    %v1204 = vmax.f32 %v1199, 1e-16
    %v1205 = vmax.f32 %v1200, 1e-16
    %v1206 = vrsqrt.pop %v1201
    %v1207 = vrsqrt.pop %v1202
    %v1208 = vrsqrt.pop %v1203
    %v1209 = vrsqrt.pop %v1204
    %v1210 = vrsqrt.pop %v1205
    %v1211 = vmul.f32 %v1183, %v1206
    %v1212 = vmul.f32 %v1186, %v1207
    %v1213 = vmul.f32 %v1189, %v1208
    %v1214 = vmul.f32 %v1192, %v1209
    %v1215 = vmul.f32 %v1195, %v1210
    %v1216 = vmul.f32 %v1211, %v1148
    %v1217 = vmul.f32 %v1212, %v1149
    %v1218 = vmul.f32 %v1213, %v1150
    %v1219 = vmul.f32 %v1214, %v1151
    %v1220 = vmul.f32 %v1215, %v1152
    %v1221 = vadd.f32 %v909, %v1216
    %v1222 = vadd.f32 %v910, %v1217
    %v1223 = vadd.f32 %v911, %v1218
    %v1224 = vadd.f32 %v912, %v1219
    %v1225 = vadd.f32 %v913, %v1220
    %v1227 = vsel %vm562, %v1148, 0
    %v1230 = vsel %vm562, %v1149, 0
    %v1233 = vsel %vm562, %v1150, 0
    %v1236 = vsel %vm562, %v1151, 0
    %v1239 = vsel %vm562, %v1152, 0
    %v1242 = vsel %vm562, %v1153, 0
    %v1245 = vsel %vm562, %v1154, 0
    %v1248 = vsel %vm562, %v1155, 0
    %1250 = vmatprep.subr.mxu0 0.0
    %1251 = vmatpush1.msra.mxu0 0.0
    %1252 = vmatprep.subr.mxu0 0.0
    %1253 = vmatpush1.msra.mxu0 0.0
    %1254 = vmatprep.subr.mxu0 0.0
    %1255 = vmatpush1.msra.mxu0 0.0
    %1256 = vmatprep.subr.mxu0 0.0
    %1257 = vmatpush1.msra.mxu0 0.0
    %1258 = vmatprep.subr.mxu0 0.0
    %1259 = vmatpush1.msra.mxu0 0.0
    %1260 = vmatprep.subr.mxu0 0.0
    %1261 = vmatpush1.msra.mxu0 0.0
    %1262 = vmatprep.subr.mxu0 0.0
    %1263 = vmatpush1.msra.mxu0 0.0
    %1264 = vmatprep.subr.mxu0 0.0
    %1265 = vmatpush1.msra.mxu0 0.0
    %1266 = vmatprep.subr.mxu0 0.0
    %1267 = vmatpush1.msra.mxu0 0.0
    %1268 = vmatprep.subr.mxu0 0.0
    %1269 = vmatpush1.msra.mxu0 0.0
    %1270 = vmatprep.subr.mxu0 0.0
    %1271 = vmatpush1.msra.mxu0 0.0
    %1272 = vmatprep.subr.mxu0 0.0
    %1273 = vmatpush1.msra.mxu0 0.0
    %1274 = vmatprep.subr.mxu0 0.0
    %1275 = vmatpush1.msra.mxu0 %v556
    %1276 = vmatprep.subr.mxu0 0.0
    %1277 = vmatpush1.msra.mxu0 %v555
    %1278 = vmatprep.subr.mxu0 0.0
    %1279 = vmatpush1.msra.mxu0 %v554
    %1280 = vmatprep.subr.mxu0 0.0
    %1281 = vmatpush1.msra.mxu0 %v553
    %1282 = vmatprep.subr.mxu0 0.0
    %1283 = vmatpush2.msra.mxu0 0.0
    %1284 = vmatprep.subr.mxu0 0.0
    %1285 = vmatpush2.msra.mxu0 0.0
    %1286 = vmatprep.subr.mxu0 0.0
    %1287 = vmatpush2.msra.mxu0 0.0
    %1288 = vmatprep.subr.mxu0 0.0
    %1289 = vmatpush2.msra.mxu0 0.0
    %1290 = vmatprep.subr.mxu0 0.0
    %1291 = vmatpush2.msra.mxu0 0.0
    %1292 = vmatprep.subr.mxu0 0.0
    %1293 = vmatpush2.msra.mxu0 0.0
    %1294 = vmatprep.subr.mxu0 0.0
    %1295 = vmatpush2.msra.mxu0 0.0
    %1296 = vmatprep.subr.mxu0 0.0
    %1297 = vmatpush2.msra.mxu0 0.0
    %1298 = vmatprep.subr.mxu0 0.0
    %1299 = vmatpush2.msra.mxu0 0.0
    %1300 = vmatprep.subr.mxu0 0.0
    %1301 = vmatpush2.msra.mxu0 0.0
    %1302 = vmatprep.subr.mxu0 0.0
    %1303 = vmatpush2.msra.mxu0 0.0
    %1304 = vmatprep.subr.mxu0 0.0
    %1305 = vmatpush2.msra.mxu0 0.0
    %1306 = vmatprep.subr.mxu0 0.0
    %1307 = vmatpush2.msra.mxu0 0.0
    %1308 = vmatprep.subr.mxu0 0.0
    %1309 = vmatpush2.msra.mxu0 0.0
    %1310 = vmatprep.subr.mxu0 0.0
    %1311 = vmatpush2.msra.mxu0 0.0
    %1312 = vmatprep.subr.mxu0 0.0
    %1313 = vmatpush2.msra.mxu0 0.0
    %1314 = vmatprep.mubr.f32.mxu0 0.0
    %1315 = vmatmul.mubr.f32.gmra.mxu0 %v1227
    %v1316 = vpop.f32.mrf.mxu0
    %v1317 = vadd.f32 0.0, %v1316
    %v1318 = vpop.f32.mrf.mxu0
    %1319 = vmatprep.mubr.f32.mxu0 0.0
    %1320 = vmatmul.mubr.f32.gmra.mxu0 %v1230
    %v1321 = vpop.f32.mrf.mxu0
    %v1322 = vadd.f32 0.0, %v1321
    %v1323 = vpop.f32.mrf.mxu0
    %1324 = vmatprep.mubr.f32.mxu0 0.0
    %1325 = vmatmul.mubr.f32.gmra.mxu0 %v1233
    %v1326 = vpop.f32.mrf.mxu0
    %v1327 = vadd.f32 0.0, %v1326
    %v1328 = vpop.f32.mrf.mxu0
    %1329 = vmatprep.mubr.f32.mxu0 0.0
    %1330 = vmatmul.mubr.f32.gmra.mxu0 %v1236
    %v1331 = vpop.f32.mrf.mxu0
    %v1332 = vadd.f32 0.0, %v1331
    %v1333 = vpop.f32.mrf.mxu0
    %1334 = vmatprep.mubr.f32.mxu0 0.0
    %1335 = vmatmul.mubr.f32.gmra.mxu0 %v1239
    %v1336 = vpop.f32.mrf.mxu0
    %v1337 = vadd.f32 0.0, %v1336
    %v1338 = vpop.f32.mrf.mxu0
    %1339 = vmatprep.mubr.f32.mxu0 0.0
    %1340 = vmatmul.mubr.f32.gmra.mxu0 %v1242
    %v1341 = vpop.f32.mrf.mxu0
    %v1342 = vadd.f32 0.0, %v1341
    %v1343 = vpop.f32.mrf.mxu0
    %1344 = vmatprep.mubr.f32.mxu0 0.0
    %1345 = vmatmul.mubr.f32.gmra.mxu0 %v1245
    %v1346 = vpop.f32.mrf.mxu0
    %v1347 = vadd.f32 0.0, %v1346
    %v1348 = vpop.f32.mrf.mxu0
    %1349 = vmatprep.mubr.f32.mxu0 0.0
    %1350 = vmatmul.mubr.f32.gmra.mxu0 %v1248
    %v1351 = vpop.f32.mrf.mxu0
    %v1352 = vadd.f32 0.0, %v1351
    %v1353 = vpop.f32.mrf.mxu0
    %1354 = vdwg.mxu0
    %1355 = vmatprep.subr.mxu0 0.0
    %1356 = vmatpush1.msra.mxu0 0.0
    %1357 = vmatprep.subr.mxu0 0.0
    %1358 = vmatpush1.msra.mxu0 0.0
    %1359 = vmatprep.subr.mxu0 0.0
    %1360 = vmatpush1.msra.mxu0 0.0
    %1361 = vmatprep.subr.mxu0 0.0
    %1362 = vmatpush1.msra.mxu0 0.0
    %1363 = vmatprep.subr.mxu0 0.0
    %1364 = vmatpush1.msra.mxu0 0.0
    %1365 = vmatprep.subr.mxu0 0.0
    %1366 = vmatpush1.msra.mxu0 0.0
    %1367 = vmatprep.subr.mxu0 0.0
    %1368 = vmatpush1.msra.mxu0 0.0
    %1369 = vmatprep.subr.mxu0 0.0
    %1370 = vmatpush1.msra.mxu0 0.0
    %1371 = vmatprep.subr.mxu0 0.0
    %1372 = vmatpush1.msra.mxu0 %v1352
    %1373 = vmatprep.subr.mxu0 0.0
    %1374 = vmatpush1.msra.mxu0 %v1347
    %1375 = vmatprep.subr.mxu0 0.0
    %1376 = vmatpush1.msra.mxu0 %v1342
    %1377 = vmatprep.subr.mxu0 0.0
    %1378 = vmatpush1.msra.mxu0 %v1337
    %1379 = vmatprep.subr.mxu0 0.0
    %1380 = vmatpush1.msra.mxu0 %v1332
    %1381 = vmatprep.subr.mxu0 0.0
    %1382 = vmatpush1.msra.mxu0 %v1327
    %1383 = vmatprep.subr.mxu0 0.0
    %1384 = vmatpush1.msra.mxu0 %v1322
    %1385 = vmatprep.subr.mxu0 0.0
    %1386 = vmatpush1.msra.mxu0 %v1317
    %1387 = vmatprep.subr.mxu0 0.0
    %1388 = vmatpush2.msra.mxu0 0.0
    %1389 = vmatprep.subr.mxu0 0.0
    %1390 = vmatpush2.msra.mxu0 0.0
    %1391 = vmatprep.subr.mxu0 0.0
    %1392 = vmatpush2.msra.mxu0 0.0
    %1393 = vmatprep.subr.mxu0 0.0
    %1394 = vmatpush2.msra.mxu0 0.0
    %1395 = vmatprep.subr.mxu0 0.0
    %1396 = vmatpush2.msra.mxu0 0.0
    %1397 = vmatprep.subr.mxu0 0.0
    %1398 = vmatpush2.msra.mxu0 0.0
    %1399 = vmatprep.subr.mxu0 0.0
    %1400 = vmatpush2.msra.mxu0 0.0
    %1401 = vmatprep.subr.mxu0 0.0
    %1402 = vmatpush2.msra.mxu0 0.0
    %1403 = vmatprep.subr.mxu0 0.0
    %1404 = vmatpush2.msra.mxu0 0.0
    %1405 = vmatprep.subr.mxu0 0.0
    %1406 = vmatpush2.msra.mxu0 0.0
    %1407 = vmatprep.subr.mxu0 0.0
    %1408 = vmatpush2.msra.mxu0 0.0
    %1409 = vmatprep.subr.mxu0 0.0
    %1410 = vmatpush2.msra.mxu0 0.0
    %1411 = vmatprep.subr.mxu0 0.0
    %1412 = vmatpush2.msra.mxu0 0.0
    %1413 = vmatprep.subr.mxu0 0.0
    %1414 = vmatpush2.msra.mxu0 0.0
    %1415 = vmatprep.subr.mxu0 0.0
    %1416 = vmatpush2.msra.mxu0 0.0
    %1417 = vmatprep.subr.mxu0 0.0
    %1418 = vmatpush2.msra.mxu0 0.0
    %1419 = vmatprep.mubr.f32.mxu0 0.0
    %1420 = vmatmul.mubr.f32.gmra.mxu0 %v708
    %v1421 = vpop.f32.mrf.mxu0
    %v1422 = vadd.f32 0.0, %v1421
    %v1423 = vpop.f32.mrf.mxu0
    %1424 = vmatprep.mubr.f32.mxu0 0.0
    %1425 = vmatmul.mubr.f32.gmra.mxu0 %v711
    %v1426 = vpop.f32.mrf.mxu0
    %v1427 = vadd.f32 0.0, %v1426
    %v1428 = vpop.f32.mrf.mxu0
    %1429 = vmatprep.mubr.f32.mxu0 0.0
    %1430 = vmatmul.mubr.f32.gmra.mxu0 %v714
    %v1431 = vpop.f32.mrf.mxu0
    %v1432 = vadd.f32 0.0, %v1431
    %v1433 = vpop.f32.mrf.mxu0
    %1434 = vmatprep.mubr.f32.mxu0 0.0
    %1435 = vmatmul.mubr.f32.gmra.mxu0 %v717
    %v1436 = vpop.f32.mrf.mxu0
    %v1437 = vadd.f32 0.0, %v1436
    %v1438 = vpop.f32.mrf.mxu0
    %1439 = vmatprep.mubr.f32.mxu0 0.0
    %1440 = vmatmul.mubr.f32.gmra.mxu0 %v720
    %v1441 = vpop.f32.mrf.mxu0
    %v1442 = vadd.f32 0.0, %v1441
    %v1443 = vpop.f32.mrf.mxu0
    %1444 = vmatprep.mubr.f32.mxu0 0.0
    %1445 = vmatmul.mubr.f32.gmra.mxu0 %v723
    %v1446 = vpop.f32.mrf.mxu0
    %v1447 = vpop.f32.mrf.mxu0
    %1448 = vmatprep.mubr.f32.mxu0 0.0
    %1449 = vmatmul.mubr.f32.gmra.mxu0 %v726
    %v1450 = vpop.f32.mrf.mxu0
    %v1451 = vpop.f32.mrf.mxu0
    %1452 = vmatprep.mubr.f32.mxu0 0.0
    %1453 = vmatmul.mubr.f32.gmra.mxu0 %v729
    %v1454 = vpop.f32.mrf.mxu0
    %v1455 = vpop.f32.mrf.mxu0
    %1456 = vdwg.mxu0
    %v1457 = vmax.f32 %v1422, 0.0
    %v1458 = vmax.f32 %v1427, 0.0
    %v1459 = vmax.f32 %v1432, 0.0
    %v1460 = vmax.f32 %v1437, 0.0
    %v1461 = vmax.f32 %v1442, 0.0
    %v1462 = vmul.f32 %v1457, %v1457
    %v1463 = vmul.f32 %v1458, %v1458
    %v1464 = vmul.f32 %v1459, %v1459
    %v1465 = vmul.f32 %v1460, %v1460
    %v1466 = vmul.f32 %v1461, %v1461
    %v1467 = vsel %vm562, %v1462, 0.0
    %1468 = vadd.xlane.f32.xlu0 %v1467
    %v1469 = vpop.xlane.xlu0 %1468
    %v1470 = vsel %vm562, %v1463, 0.0
    %1471 = vadd.xlane.f32.xlu0 %v1470
    %v1472 = vpop.xlane.xlu0 %1471
    %v1473 = vsel %vm562, %v1464, 0.0
    %1474 = vadd.xlane.f32.xlu0 %v1473
    %v1475 = vpop.xlane.xlu0 %1474
    %v1476 = vsel %vm562, %v1465, 0.0
    %1477 = vadd.xlane.f32.xlu0 %v1476
    %v1478 = vpop.xlane.xlu0 %1477
    %v1479 = vsel %vm562, %v1466, 0.0
    %1480 = vadd.xlane.f32.xlu0 %v1479
    %v1481 = vpop.xlane.xlu0 %1480
    %v1482 = vmul.f32 %v1457, %v440
    %v1483 = vmul.f32 %v1458, %v442
    %v1484 = vmul.f32 %v1459, %v444
    %v1485 = vmul.f32 %v1460, %v446
    %v1486 = vmul.f32 %v1461, %v448
    %v1487 = vsel %vm562, %v1482, 0.0
    %1488 = vadd.xlane.f32.xlu0 %v1487
    %v1489 = vpop.xlane.xlu0 %1488
    %v1490 = vsel %vm562, %v1483, 0.0
    %1491 = vadd.xlane.f32.xlu0 %v1490
    %v1492 = vpop.xlane.xlu0 %1491
    %v1493 = vsel %vm562, %v1484, 0.0
    %1494 = vadd.xlane.f32.xlu0 %v1493
    %v1495 = vpop.xlane.xlu0 %1494
    %v1496 = vsel %vm562, %v1485, 0.0
    %1497 = vadd.xlane.f32.xlu0 %v1496
    %v1498 = vpop.xlane.xlu0 %1497
    %v1499 = vsel %vm562, %v1486, 0.0
    %1500 = vadd.xlane.f32.xlu0 %v1499
    %v1501 = vpop.xlane.xlu0 %1500
    %v1502 = vmul.f32 %v1469, %v565
    %v1503 = vmul.f32 %v1472, %v568
    %v1504 = vmul.f32 %v1475, %v571
    %v1505 = vmul.f32 %v1478, %v574
    %v1506 = vmul.f32 %v1481, %v577
    %v1507 = vmax.f32 %v1502, 1e-16
    %v1508 = vmax.f32 %v1503, 1e-16
    %v1509 = vmax.f32 %v1504, 1e-16
    %v1510 = vmax.f32 %v1505, 1e-16
    %v1511 = vmax.f32 %v1506, 1e-16
    %v1512 = vrsqrt.pop %v1507
    %v1513 = vrsqrt.pop %v1508
    %v1514 = vrsqrt.pop %v1509
    %v1515 = vrsqrt.pop %v1510
    %v1516 = vrsqrt.pop %v1511
    %v1517 = vmul.f32 %v1489, %v1512
    %v1518 = vmul.f32 %v1492, %v1513
    %v1519 = vmul.f32 %v1495, %v1514
    %v1520 = vmul.f32 %v1498, %v1515
    %v1521 = vmul.f32 %v1501, %v1516
    %v1522 = vmul.f32 %v1517, %v1457
    %v1523 = vmul.f32 %v1518, %v1458
    %v1524 = vmul.f32 %v1519, %v1459
    %v1525 = vmul.f32 %v1520, %v1460
    %v1526 = vmul.f32 %v1521, %v1461
    %v1527 = vadd.f32 %v1221, %v1522
    %v1528 = vadd.f32 %v1222, %v1523
    %v1529 = vadd.f32 %v1223, %v1524
    %v1530 = vadd.f32 %v1224, %v1525
    %v1531 = vadd.f32 %v1225, %v1526
    %v1532 = vmul.f32 %v1527, 0.33333334
    %v1533 = vmul.f32 %v1528, 0.33333334
    %v1534 = vmul.f32 %v1529, 0.33333334
    %v1535 = vmul.f32 %v1530, 0.33333334
    %v1536 = vmul.f32 %v1531, 0.33333334
    %v1538 = vsel %vm562, %v1532, 0
    %v1541 = vsel %vm562, %v1533, 0
    %v1544 = vsel %vm562, %v1534, 0
    %v1547 = vsel %vm562, %v1535, 0
    %v1550 = vsel %vm562, %v1536, 0
    %1552 = vmatprep.subr.mxu0 0.0
    %1553 = vmatpush1.xpose.msra.mxu0 0.0
    %1554 = vmatprep.subr.mxu0 0.0
    %1555 = vmatpush1.xpose.msra.mxu0 0.0
    %1556 = vmatprep.subr.mxu0 0.0
    %1557 = vmatpush1.xpose.msra.mxu0 0.0
    %1558 = vmatprep.subr.mxu0 0.0
    %1559 = vmatpush1.xpose.msra.mxu0 0.0
    %1560 = vmatprep.subr.mxu0 0.0
    %1561 = vmatpush1.xpose.msra.mxu0 0.0
    %1562 = vmatprep.subr.mxu0 0.0
    %1563 = vmatpush1.xpose.msra.mxu0 0.0
    %1564 = vmatprep.subr.mxu0 0.0
    %1565 = vmatpush1.xpose.msra.mxu0 0.0
    %1566 = vmatprep.subr.mxu0 0.0
    %1567 = vmatpush1.xpose.msra.mxu0 0.0
    %1568 = vmatprep.subr.mxu0 0.0
    %1569 = vmatpush1.xpose.msra.mxu0 0.0
    %1570 = vmatprep.subr.mxu0 0.0
    %1571 = vmatpush1.xpose.msra.mxu0 0.0
    %1572 = vmatprep.subr.mxu0 0.0
    %1573 = vmatpush1.xpose.msra.mxu0 0.0
    %1574 = vmatprep.subr.mxu0 0.0
    %1575 = vmatpush1.xpose.msra.mxu0 0.0
    %1576 = vmatprep.subr.mxu0 0.0
    %1577 = vmatpush1.xpose.msra.mxu0 0.0
    %1578 = vmatprep.subr.mxu0 0.0
    %1579 = vmatpush1.xpose.msra.mxu0 0.0
    %1580 = vmatprep.subr.mxu0 0.0
    %1581 = vmatpush1.xpose.msra.mxu0 %v1550
    %1582 = vmatprep.subr.mxu0 0.0
    %1583 = vmatpush1.xpose.msra.mxu0 %v1547
    %1584 = vmatprep.subr.mxu0 0.0
    %1585 = vmatpush2.xpose.msra.mxu0 0.0
    %1586 = vmatprep.subr.mxu0 0.0
    %1587 = vmatpush2.xpose.msra.mxu0 0.0
    %1588 = vmatprep.subr.mxu0 0.0
    %1589 = vmatpush2.xpose.msra.mxu0 0.0
    %1590 = vmatprep.subr.mxu0 0.0
    %1591 = vmatpush2.xpose.msra.mxu0 0.0
    %1592 = vmatprep.subr.mxu0 0.0
    %1593 = vmatpush2.xpose.msra.mxu0 0.0
    %1594 = vmatprep.subr.mxu0 0.0
    %1595 = vmatpush2.xpose.msra.mxu0 0.0
    %1596 = vmatprep.subr.mxu0 0.0
    %1597 = vmatpush2.xpose.msra.mxu0 0.0
    %1598 = vmatprep.subr.mxu0 0.0
    %1599 = vmatpush2.xpose.msra.mxu0 0.0
    %1600 = vmatprep.subr.mxu0 0.0
    %1601 = vmatpush2.xpose.msra.mxu0 0.0
    %1602 = vmatprep.subr.mxu0 0.0
    %1603 = vmatpush2.xpose.msra.mxu0 0.0
    %1604 = vmatprep.subr.mxu0 0.0
    %1605 = vmatpush2.xpose.msra.mxu0 0.0
    %1606 = vmatprep.subr.mxu0 0.0
    %1607 = vmatpush2.xpose.msra.mxu0 0.0
    %1608 = vmatprep.subr.mxu0 0.0
    %1609 = vmatpush2.xpose.msra.mxu0 0.0
    %1610 = vmatprep.subr.mxu0 0.0
    %1611 = vmatpush2.xpose.msra.mxu0 0.0
    %1612 = vmatprep.subr.mxu0 0.0
    %1613 = vmatpush2.xpose.msra.mxu0 0.0
    %1614 = vmatprep.subr.mxu0 0.0
    %1615 = vmatpush2.xpose.msra.mxu0 0.0
    %1616 = vmatprep.mubr.f32.mxu0 0.0
    %1617 = vmatmul.mubr.f32.gmra.mxu0 %v1538
    %v1618 = vpop.f32.mrf.mxu0
    %v1619 = vadd.f32 0.0, %v1618
    %v1620 = vpop.f32.mrf.mxu0
    %1621 = vmatprep.mubr.f32.mxu0 0.0
    %1622 = vmatmul.mubr.f32.gmra.mxu0 %v1541
    %v1623 = vpop.f32.mrf.mxu0
    %v1624 = vadd.f32 0.0, %v1623
    %v1625 = vpop.f32.mrf.mxu0
    %1626 = vmatprep.mubr.f32.mxu0 0.0
    %1627 = vmatmul.mubr.f32.gmra.mxu0 %v1544
    %v1628 = vpop.f32.mrf.mxu0
    %v1629 = vadd.f32 0.0, %v1628
    %v1630 = vpop.f32.mrf.mxu0
    %1631 = vdwg.mxu0
    %1632 = vst.msk [vmem:[%s9] sm:$0xff] %vm214, %v1619
    %1633 = vst.msk [vmem:[%s9 + $0x8] sm:$0xff] %vm214, %v1624
    %1634 = vst.msk [vmem:[%s9 + $0x10] sm:$0xff] %vm214, %v1629
    // Predicated region
    $region62: #{tpu_custom_call.1} parent=1 // pred_check
      _
    $region63: #{tpu_custom_call.1} parent=1 // pred_check_branch
      %1636 = sbr.rel (0) target = $region65
    $region64: #{tpu_custom_call.1} parent=1 // pred_region
      _
    $region65: #{tpu_custom_call.1} parent=1 // pred_fallthru
      _
    // Predicated region
    $region66: #{tpu_custom_call.1} parent=1 // pred_check
      _
    $region67: #{tpu_custom_call.1} parent=1 // pred_check_branch
      %1638 = sbr.rel (0) target = $region69
    $region68: #{tpu_custom_call.1} parent=1 // pred_region
      _
    $region69: #{tpu_custom_call.1} parent=1 // pred_fallthru
      _
    %1639 = vsyncpa [#allocation3], 1
    %1640 = vsyncpa [#allocation5], 1
    %1641 = vsyncpa [#allocation8], 1
    %1642 = vsyncpa [#allocation11], 1

</llo_original>
